<compile_context>
chip_gen: v7x
topology: tpu7x:2x2x1
jax: 0.10.0
libtpu: 0.0.40
codegen_flags: <defaults>
</compile_context>

<pallas_src>
import jax
import jax.numpy as jnp
from jax.experimental import pallas as pl
from jax.experimental.pallas import tpu as pltpu

LEAK = 0.2        # LeakyReLU negative slope
BN_EPS = 1e-5     # PyTorch BatchNorm2d default eps
LANE = 128
SUBLANE = 8
VMEM_LIMIT = 32 * 1024 * 1024     # raise v5e's 16MiB scoped default; <= v6e/v7x defaults
TILE_BUDGET = 12 * 1024 * 1024    # working-set budget used to size the M tile


def _round_up(x, m):
    return (x + m - 1) // m * m


# ----------------------------- Pallas kernels ------------------------------

def conv_lrelu_kernel(p_ref, w_ref, o_ref):
    # conv-as-matmul (bf16 in, f32 acc) -> LeakyReLU(0.2) -> bf16 store
    y = jnp.dot(p_ref[...], w_ref[...], preferred_element_type=jnp.float32)
    o_ref[...] = jnp.where(y >= 0, y, LEAK * y).astype(o_ref.dtype)


def conv_stats_kernel(p_ref, w_ref, y_ref, sum_ref, sq_ref):
    # BN pass A: tiled conv matmul, plus grid-carried per-channel sum and
    # sum-of-squares accumulators (output blocks resident across the M axis).
    i = pl.program_id(0)
    y = jnp.dot(p_ref[...], w_ref[...], preferred_element_type=jnp.float32)
    y_ref[...] = y

    @pl.when(i == 0)
    def _():
        sum_ref[...] = jnp.zeros_like(sum_ref)
        sq_ref[...] = jnp.zeros_like(sq_ref)

    # broadcast the per-tile channel sums into all 8 sublanes of the resident
    # accumulators (lane-dense, avoids 1-row masked stores).
    sum_ref[...] += jnp.sum(y, axis=0, keepdims=True)
    sq_ref[...] += jnp.sum(y * y, axis=0, keepdims=True)


def bn_lrelu_kernel(y_ref, scale_ref, shift_ref, o_ref):
    # BN pass B: y * scale + shift (scale/shift already fold mean/var/gamma/beta)
    # -> LeakyReLU(0.2) -> bf16 store
    yh = y_ref[...] * scale_ref[...] + shift_ref[...]
    o_ref[...] = jnp.where(yh >= 0, yh, LEAK * yh).astype(o_ref.dtype)


def linear_sigmoid_kernel(x_ref, w_ref, o_ref):
    # Linear (no bias), K-tiled with the f32 output block as the accumulator,
    # sigmoid applied on the last K tile.
    k = pl.program_id(0)

    @pl.when(k == 0)
    def _():
        o_ref[...] = jnp.zeros_like(o_ref)

    o_ref[...] += jnp.dot(x_ref[...], w_ref[...],
                          preferred_element_type=jnp.float32)

    @pl.when(k == pl.num_programs(0) - 1)
    def _():
        o_ref[...] = jax.nn.sigmoid(o_ref[...])


# ------------------------------ glue helpers -------------------------------

def im2col(x_nhwc, k=4, stride=2, pad=1):
    """x: [N,H,W,C] -> bf16 patches [N*Ho*Wo, k*k*C] (kh, kw, Cin ordering)."""
    N, H, W, C = x_nhwc.shape
    xp = jnp.pad(x_nhwc, ((0, 0), (pad, pad), (pad, pad), (0, 0)))
    Ho = (H + 2 * pad - k) // stride + 1
    Wo = (W + 2 * pad - k) // stride + 1
    cols = []
    for kh in range(k):
        for kw in range(k):
            cols.append(xp[:, kh:kh + stride * Ho:stride,
                           kw:kw + stride * Wo:stride, :])
    patches = jnp.stack(cols, axis=3)                         # [N,Ho,Wo,k*k,C]
    # TODO(synk): fold the im2col gather into the Pallas kernel (Element-style
    # index_maps over the padded NHWC input) to avoid materializing the 4x
    # patch blow-up in HBM; for now the patches are at least emitted in bf16.
    return (patches.reshape(N * Ho * Wo, k * k * C).astype(jnp.bfloat16),
            (N, Ho, Wo))


def conv_w_to_mat(w, cout_pad):
    """[Cout,Cin,kh,kw] -> bf16 matmul weight [kh*kw*Cin, Cout_padded]."""
    co, ci, kh, kw = w.shape
    wm = jnp.transpose(w, (2, 3, 1, 0)).reshape(kh * kw * ci, co)
    wm = jnp.pad(wm, ((0, 0), (0, cout_pad - co)))
    return wm.astype(jnp.bfloat16)


def _pick_tm(m_rows, k_dim, cout_pad):
    """Largest M tile (multiple of 8, <=1024) whose double-buffered bf16 patch
    tile + f32 conv-out tile + (conservatively double-counted) bf16 weight fit
    the TILE_BUDGET — safe on v7x's 64MiB VMEM and v5e's scoped default."""
    weight_bytes = 2 * k_dim * cout_pad * 2
    per_row = 2 * (k_dim * 2 + cout_pad * 4)
    tm = max(SUBLANE, (TILE_BUDGET - weight_bytes) // per_row)
    tm = max(SUBLANE, (min(1024, tm) // SUBLANE) * SUBLANE)
    return min(tm, _round_up(m_rows, SUBLANE))


def _mosaic(sem):
    return pltpu.CompilerParams(dimension_semantics=sem,
                                vmem_limit_bytes=VMEM_LIMIT)


# ------------------------------- layer calls -------------------------------

def conv_lrelu_layer(x_nhwc, w):
    cout = w.shape[0]
    cp = _round_up(cout, LANE)
    p, (N, Ho, Wo) = im2col(x_nhwc)
    m, k = p.shape
    tm = _pick_tm(m, k, cp)
    mp = _round_up(m, tm)
    p = jnp.pad(p, ((0, mp - m), (0, 0)))
    w_mat = conv_w_to_mat(w, cp)

    y = pl.pallas_call(
        conv_lrelu_kernel,
        grid=(mp // tm,),
        in_specs=[pl.BlockSpec((tm, k), lambda i: (i, 0)),
                  pl.BlockSpec((k, cp), lambda i: (0, 0))],
        out_specs=pl.BlockSpec((tm, cp), lambda i: (i, 0)),
        out_shape=jax.ShapeDtypeStruct((mp, cp), jnp.bfloat16),
        compiler_params=_mosaic(("parallel",)),
    )(p, w_mat)
    return y[:m, :cout].reshape(N, Ho, Wo, cout)


def conv_bn_lrelu_layer(x_nhwc, w, gamma, beta):
    cout = w.shape[0]
    cp = _round_up(cout, LANE)
    p, (N, Ho, Wo) = im2col(x_nhwc)
    m, k = p.shape
    tm = _pick_tm(m, k, cp)
    mp = _round_up(m, tm)
    p = jnp.pad(p, ((0, mp - m), (0, 0)))   # zero rows contribute 0 to the stats
    w_mat = conv_w_to_mat(w, cp)
    grid = (mp // tm,)

    # ---- pass A: conv matmul + per-channel sum / sum-of-squares ----
    y, s, sq = pl.pallas_call(
        conv_stats_kernel,
        grid=grid,
        in_specs=[pl.BlockSpec((tm, k), lambda i: (i, 0)),
                  pl.BlockSpec((k, cp), lambda i: (0, 0))],
        out_specs=[pl.BlockSpec((tm, cp), lambda i: (i, 0)),
                   pl.BlockSpec((SUBLANE, cp), lambda i: (0, 0)),
                   pl.BlockSpec((SUBLANE, cp), lambda i: (0, 0))],
        out_shape=[jax.ShapeDtypeStruct((mp, cp), jnp.float32),
                   jax.ShapeDtypeStruct((SUBLANE, cp), jnp.float32),
                   jax.ShapeDtypeStruct((SUBLANE, cp), jnp.float32)],
        compiler_params=_mosaic(("arbitrary",)),   # carries the stats accumulators
    )(p, w_mat)

    # ---- tiny O(C) glue: fold batch stats + affine into scale/shift ----
    count = jnp.float32(m)                          # true N*Ho*Wo row count
    mean = s[0] / count
    var = jnp.maximum(sq[0] / count - mean * mean, 0.0)   # biased var (PyTorch)
    inv = jax.lax.rsqrt(var + BN_EPS)
    gp = jnp.pad(gamma.reshape(-1).astype(jnp.float32), (0, cp - cout))
    bp = jnp.pad(beta.reshape(-1).astype(jnp.float32), (0, cp - cout))
    scale = (gp * inv).reshape(1, cp)
    shift = (bp - mean * gp * inv).reshape(1, cp)

    # ---- pass B: normalize + affine + LeakyReLU ----
    out = pl.pallas_call(
        bn_lrelu_kernel,
        grid=grid,
        in_specs=[pl.BlockSpec((tm, cp), lambda i: (i, 0)),
                  pl.BlockSpec((1, cp), lambda i: (0, 0)),
                  pl.BlockSpec((1, cp), lambda i: (0, 0))],
        out_specs=pl.BlockSpec((tm, cp), lambda i: (i, 0)),
        out_shape=jax.ShapeDtypeStruct((mp, cp), jnp.bfloat16),
        compiler_params=_mosaic(("parallel",)),
    )(y, scale, shift)
    return out[:m, :cout].reshape(N, Ho, Wo, cout)


def linear_sigmoid(x_flat, w_lin):
    n, k = x_flat.shape
    n_p = _round_up(n, SUBLANE)
    tk = min(2048, _round_up(k, LANE))
    kp = _round_up(k, tk)
    x = jnp.pad(x_flat.astype(jnp.bfloat16), ((0, n_p - n), (0, kp - k)))
    w = jnp.pad(w_lin.astype(jnp.bfloat16),
                ((0, kp - k), (0, LANE - w_lin.shape[1])))

    out = pl.pallas_call(
        linear_sigmoid_kernel,
        grid=(kp // tk,),
        in_specs=[pl.BlockSpec((n_p, tk), lambda i: (0, i)),
                  pl.BlockSpec((tk, LANE), lambda i: (i, 0))],
        out_specs=pl.BlockSpec((n_p, LANE), lambda i: (0, 0)),
        out_shape=jax.ShapeDtypeStruct((n_p, LANE), jnp.float32),
        compiler_params=_mosaic(("arbitrary",)),
    )(x, w)
    return out[:n, :w_lin.shape[1]]


# ------------------------------ forward pass -------------------------------

def discriminator_forward(x_nchw, params):
    w1, w2, w3, g2, b2, g3, b3, wlin = params
    x = jnp.transpose(x_nchw, (0, 2, 3, 1)).astype(jnp.bfloat16)   # NCHW -> NHWC

    y = conv_lrelu_layer(x, w1)                 # Conv + LeakyReLU
    y = conv_bn_lrelu_layer(y, w2, g2, b2)      # Conv + BN + LeakyReLU
    y = conv_bn_lrelu_layer(y, w3, g3, b3)      # Conv + BN + LeakyReLU

    N = y.shape[0]
    flat = jnp.transpose(y, (0, 3, 1, 2)).reshape(N, -1)  # PyTorch NCHW flatten
    return linear_sigmoid(flat, wlin)           # Linear + Sigmoid


# ---------------------------------- main -----------------------------------

if __name__ == "__main__":
    key = jax.random.PRNGKey(0)
    ks = jax.random.split(key, 6)

    # small shapes consistent with the module: img_size % 2**3 == 0
    batch, img_channels, img_size = 2, 4, 16
    hidden = [8, 16, 32]

    x = jax.random.normal(ks[0], (batch, img_channels, img_size, img_size),
                          jnp.float32)

    # deterministic synthetic parameters (DCGAN-ish init scale)
    w1 = 0.02 * jax.random.normal(ks[1], (hidden[0], img_channels, 4, 4), jnp.float32)
    w2 = 0.02 * jax.random.normal(ks[2], (hidden[1], hidden[0], 4, 4), jnp.float32)
    w3 = 0.02 * jax.random.normal(ks[3], (hidden[2], hidden[1], 4, 4), jnp.float32)
    g2, b2 = jnp.ones((1, hidden[1]), jnp.float32), jnp.zeros((1, hidden[1]), jnp.float32)
    g3, b3 = jnp.ones((1, hidden[2]), jnp.float32), jnp.zeros((1, hidden[2]), jnp.float32)
    wlin = 0.02 * jax.random.normal(
        ks[4], (hidden[2] * (img_size // 8) * (img_size // 8), 1), jnp.float32)

    params = (w1, w2, w3, g2, b2, g3, b3, wlin)

    forward = jax.jit(discriminator_forward)
    out = forward(x, params)
    jax.block_until_ready(out)
    assert out.shape == (batch, 1)
    assert bool(jnp.all((out >= 0.0) & (out <= 1.0)))
    print("KERNEL_OK")
</pallas_src>

<mosaic_0001>
module attributes {stable_mosaic.version = 11 : i64} {
  func.func @conv_lrelu_kernel(%arg0: i32, %arg1: memref<128x64xbf16, #tpu.memory_space<vmem>>, %arg2: memref<64x128xbf16, #tpu.memory_space<vmem>>, %arg3: memref<128x128xbf16, #tpu.memory_space<vmem>>) attributes {dimension_semantics = [#tpu.dimension_semantics<parallel>], iteration_bounds = array<i64: 1>, scalar_prefetch = 0 : i64, scratch_operands = 0 : i64, tpu.core_type = #tpu.core_type<tc>, window_params = [{transform_indices = @transform_0, window_bounds = array<i64: 128, 64>}, {pipeline_mode = #tpu.pipeline_mode<synchronous>, transform_indices = @transform_1, window_bounds = array<i64: 64, 128>}, {transform_indices = @transform_2, window_bounds = array<i64: 128, 128>}]} {
    %c0 = arith.constant 0 : index
    %c0_0 = arith.constant 0 : index
    %0 = vector.load %arg1[%c0, %c0_0] : memref<128x64xbf16, #tpu.memory_space<vmem>>, vector<128x64xbf16>
    %c0_1 = arith.constant 0 : index
    %c0_2 = arith.constant 0 : index
    %1 = vector.load %arg2[%c0_1, %c0_2] : memref<64x128xbf16, #tpu.memory_space<vmem>>, vector<64x128xbf16>
    %cst = arith.constant dense<0.000000e+00> : vector<128x128xf32>
    %2 = tpu.matmul %0, %1, %cst {dimension_numbers = #tpu.dot_dimension_numbers<[1], [0], [0], [1], [0, 0, 1, 1], [], []>} : vector<128x64xbf16>, vector<64x128xbf16>, vector<128x128xf32> -> vector<128x128xf32>
    %cst_3 = arith.constant 0.000000e+00 : f32
    %3 = vector.broadcast %cst_3 : f32 to vector<128x128xf32>
    %4 = arith.cmpf oge, %2, %3 : vector<128x128xf32>
    %cst_4 = arith.constant 2.000000e-01 : f32
    %5 = vector.broadcast %cst_4 : f32 to vector<128x128xf32>
    %6 = arith.mulf %5, %2 : vector<128x128xf32>
    %7 = arith.select %4, %2, %6 : vector<128x128xi1>, vector<128x128xf32>
    %8 = arith.truncf %7 : vector<128x128xf32> to vector<128x128xbf16>
    %c0_5 = arith.constant 0 : index
    %c0_6 = arith.constant 0 : index
    %9 = vector.load %arg3[%c0_5, %c0_6] : memref<128x128xbf16, #tpu.memory_space<vmem>>, vector<128x128xbf16>
    tpu.vector_store %arg3[%c0_5, %c0_6], %8 {strides = array<i32>} : memref<128x128xbf16, #tpu.memory_space<vmem>>, vector<128x128xbf16>,
    return
  }
  func.func @transform_0(%arg0: i32) -> (i32, i32) {
    %c0_i32 = arith.constant 0 : i32
    %c0_i32_0 = arith.constant 0 : i32
    return %arg0, %c0_i32 : i32, i32
  }
  func.func @transform_1(%arg0: i32) -> (i32, i32) {
    %c0_i32 = arith.constant 0 : i32
    %c0_i32_0 = arith.constant 0 : i32
    %c0_i32_1 = arith.constant 0 : i32
    return %c0_i32, %c0_i32_0 : i32, i32
  }
  func.func @transform_2(%arg0: i32) -> (i32, i32) {
    %c0_i32 = arith.constant 0 : i32
    %c0_i32_0 = arith.constant 0 : i32
    return %arg0, %c0_i32 : i32, i32
  }
}

module attributes {stable_mosaic.version = 11 : i64} {
  func.func @conv_stats_kernel(%arg0: i32, %arg1: memref<32x128xbf16, #tpu.memory_space<vmem>>, %arg2: memref<128x128xbf16, #tpu.memory_space<vmem>>, %arg3: memref<32x128xf32, #tpu.memory_space<vmem>>, %arg4: memref<8x128xf32, #tpu.memory_space<vmem>>, %arg5: memref<8x128xf32, #tpu.memory_space<vmem>>) attributes {dimension_semantics = [#tpu.dimension_semantics<arbitrary>], iteration_bounds = array<i64: 1>, scalar_prefetch = 0 : i64, scratch_operands = 0 : i64, tpu.core_type = #tpu.core_type<tc>, window_params = [{transform_indices = @transform_0, window_bounds = array<i64: 32, 128>}, {pipeline_mode = #tpu.pipeline_mode<synchronous>, transform_indices = @transform_1, window_bounds = array<i64: 128, 128>}, {transform_indices = @transform_2, window_bounds = array<i64: 32, 128>}, {pipeline_mode = #tpu.pipeline_mode<synchronous>, transform_indices = @transform_3, window_bounds = array<i64: 8, 128>}, {pipeline_mode = #tpu.pipeline_mode<synchronous>, transform_indices = @transform_4, window_bounds = array<i64: 8, 128>}]} {
    %c0 = arith.constant 0 : index
    %c0_0 = arith.constant 0 : index
    %0 = vector.load %arg1[%c0, %c0_0] : memref<32x128xbf16, #tpu.memory_space<vmem>>, vector<32x128xbf16>
    %c0_1 = arith.constant 0 : index
    %c0_2 = arith.constant 0 : index
    %1 = vector.load %arg2[%c0_1, %c0_2] : memref<128x128xbf16, #tpu.memory_space<vmem>>, vector<128x128xbf16>
    %cst = arith.constant dense<0.000000e+00> : vector<32x128xf32>
    %2 = tpu.matmul %0, %1, %cst {dimension_numbers = #tpu.dot_dimension_numbers<[1], [0], [0], [1], [0, 0, 1, 1], [], []>} : vector<32x128xbf16>, vector<128x128xbf16>, vector<32x128xf32> -> vector<32x128xf32>
    %c0_3 = arith.constant 0 : index
    %c0_4 = arith.constant 0 : index
    %3 = vector.load %arg3[%c0_3, %c0_4] : memref<32x128xf32, #tpu.memory_space<vmem>>, vector<32x128xf32>
    tpu.vector_store %arg3[%c0_3, %c0_4], %2 {strides = array<i32>} : memref<32x128xf32, #tpu.memory_space<vmem>>, vector<32x128xf32>,
    %c0_i32 = arith.constant 0 : i32
    %4 = arith.cmpi eq, %arg0, %c0_i32 : i32
    %5 = arith.extui %4 : i1 to i32
    %c0_i32_5 = arith.constant 0 : i32
    %6 = arith.cmpi ne, %5, %c0_i32_5 : i32
    scf.if %6 {
      %cst_16 = arith.constant 0.000000e+00 : f32
      %20 = vector.broadcast %cst_16 : f32 to vector<8x128xf32>
      %c0_17 = arith.constant 0 : index
      %c0_18 = arith.constant 0 : index
      %21 = vector.load %arg4[%c0_17, %c0_18] : memref<8x128xf32, #tpu.memory_space<vmem>>, vector<8x128xf32>
      tpu.vector_store %arg4[%c0_17, %c0_18], %20 {strides = array<i32>} : memref<8x128xf32, #tpu.memory_space<vmem>>, vector<8x128xf32>,
      %cst_19 = arith.constant 0.000000e+00 : f32
      %22 = vector.broadcast %cst_19 : f32 to vector<8x128xf32>
      %c0_20 = arith.constant 0 : index
      %c0_21 = arith.constant 0 : index
      %23 = vector.load %arg5[%c0_20, %c0_21] : memref<8x128xf32, #tpu.memory_space<vmem>>, vector<8x128xf32>
      tpu.vector_store %arg5[%c0_20, %c0_21], %22 {strides = array<i32>} : memref<8x128xf32, #tpu.memory_space<vmem>>, vector<8x128xf32>,
    } else {
    }
    %c0_6 = arith.constant 0 : index
    %c0_7 = arith.constant 0 : index
    %7 = vector.load %arg4[%c0_6, %c0_7] : memref<8x128xf32, #tpu.memory_space<vmem>>, vector<8x128xf32>
    %cst_8 = arith.constant dense<0.000000e+00> : vector<128xf32>
    %8 = vector.multi_reduction <add>, %2, %cst_8 [0] : vector<32x128xf32> to vector<128xf32>
    %9 = vector.shape_cast %8 : vector<128xf32> to vector<1x128xf32>
    %10 = vector.broadcast %9 : vector<1x128xf32> to vector<8x128xf32>
    %11 = arith.addf %7, %10 : vector<8x128xf32>
    %c0_9 = arith.constant 0 : index
    %c0_10 = arith.constant 0 : index
    %12 = vector.load %arg4[%c0_9, %c0_10] : memref<8x128xf32, #tpu.memory_space<vmem>>, vector<8x128xf32>
    tpu.vector_store %arg4[%c0_9, %c0_10], %11 {strides = array<i32>} : memref<8x128xf32, #tpu.memory_space<vmem>>, vector<8x128xf32>,
    %c0_11 = arith.constant 0 : index
    %c0_12 = arith.constant 0 : index
    %13 = vector.load %arg5[%c0_11, %c0_12] : memref<8x128xf32, #tpu.memory_space<vmem>>, vector<8x128xf32>
    %14 = arith.mulf %2, %2 : vector<32x128xf32>
    %cst_13 = arith.constant dense<0.000000e+00> : vector<128xf32>
    %15 = vector.multi_reduction <add>, %14, %cst_13 [0] : vector<32x128xf32> to vector<128xf32>
    %16 = vector.shape_cast %15 : vector<128xf32> to vector<1x128xf32>
    %17 = vector.broadcast %16 : vector<1x128xf32> to vector<8x128xf32>
    %18 = arith.addf %13, %17 : vector<8x128xf32>
    %c0_14 = arith.constant 0 : index
    %c0_15 = arith.constant 0 : index
    %19 = vector.load %arg5[%c0_14, %c0_15] : memref<8x128xf32, #tpu.memory_space<vmem>>, vector<8x128xf32>
    tpu.vector_store %arg5[%c0_14, %c0_15], %18 {strides = array<i32>} : memref<8x128xf32, #tpu.memory_space<vmem>>, vector<8x128xf32>,
    return
  }
  func.func @transform_0(%arg0: i32) -> (i32, i32) {
    %c0_i32 = arith.constant 0 : i32
    %c0_i32_0 = arith.constant 0 : i32
    return %arg0, %c0_i32 : i32, i32
  }
  func.func @transform_1(%arg0: i32) -> (i32, i32) {
    %c0_i32 = arith.constant 0 : i32
    %c0_i32_0 = arith.constant 0 : i32
    %c0_i32_1 = arith.constant 0 : i32
    return %c0_i32, %c0_i32_0 : i32, i32
  }
  func.func @transform_2(%arg0: i32) -> (i32, i32) {
    %c0_i32 = arith.constant 0 : i32
    %c0_i32_0 = arith.constant 0 : i32
    return %arg0, %c0_i32 : i32, i32
  }
  func.func @transform_3(%arg0: i32) -> (i32, i32) {
    %c0_i32 = arith.constant 0 : i32
    %c0_i32_0 = arith.constant 0 : i32
    %c0_i32_1 = arith.constant 0 : i32
    return %c0_i32, %c0_i32_0 : i32, i32
  }
  func.func @transform_4(%arg0: i32) -> (i32, i32) {
    %c0_i32 = arith.constant 0 : i32
    %c0_i32_0 = arith.constant 0 : i32
    %c0_i32_1 = arith.constant 0 : i32
    return %c0_i32, %c0_i32_0 : i32, i32
  }
}

module attributes {stable_mosaic.version = 11 : i64} {
  func.func @bn_lrelu_kernel(%arg0: i32, %arg1: memref<32x128xf32, #tpu.memory_space<vmem>>, %arg2: memref<1x128xf32, #tpu.memory_space<vmem>>, %arg3: memref<1x128xf32, #tpu.memory_space<vmem>>, %arg4: memref<32x128xbf16, #tpu.memory_space<vmem>>) attributes {dimension_semantics = [#tpu.dimension_semantics<parallel>], iteration_bounds = array<i64: 1>, scalar_prefetch = 0 : i64, scratch_operands = 0 : i64, tpu.core_type = #tpu.core_type<tc>, window_params = [{transform_indices = @transform_0, window_bounds = array<i64: 32, 128>}, {pipeline_mode = #tpu.pipeline_mode<synchronous>, transform_indices = @transform_1, window_bounds = array<i64: 1, 128>}, {pipeline_mode = #tpu.pipeline_mode<synchronous>, transform_indices = @transform_2, window_bounds = array<i64: 1, 128>}, {transform_indices = @transform_3, window_bounds = array<i64: 32, 128>}]} {
    %c0 = arith.constant 0 : index
    %c0_0 = arith.constant 0 : index
    %0 = vector.load %arg1[%c0, %c0_0] : memref<32x128xf32, #tpu.memory_space<vmem>>, vector<32x128xf32>
    %c0_1 = arith.constant 0 : index
    %c0_2 = arith.constant 0 : index
    %1 = vector.load %arg2[%c0_1, %c0_2] : memref<1x128xf32, #tpu.memory_space<vmem>>, vector<1x128xf32>
    %2 = vector.broadcast %1 : vector<1x128xf32> to vector<32x128xf32>
    %3 = arith.mulf %0, %2 : vector<32x128xf32>
    %c0_3 = arith.constant 0 : index
    %c0_4 = arith.constant 0 : index
    %4 = vector.load %arg3[%c0_3, %c0_4] : memref<1x128xf32, #tpu.memory_space<vmem>>, vector<1x128xf32>
    %5 = vector.broadcast %4 : vector<1x128xf32> to vector<32x128xf32>
    %6 = arith.addf %3, %5 : vector<32x128xf32>
    %cst = arith.constant 0.000000e+00 : f32
    %7 = vector.broadcast %cst : f32 to vector<32x128xf32>
    %8 = arith.cmpf oge, %6, %7 : vector<32x128xf32>
    %cst_5 = arith.constant 2.000000e-01 : f32
    %9 = vector.broadcast %cst_5 : f32 to vector<32x128xf32>
    %10 = arith.mulf %9, %6 : vector<32x128xf32>
    %11 = arith.select %8, %6, %10 : vector<32x128xi1>, vector<32x128xf32>
    %12 = arith.truncf %11 : vector<32x128xf32> to vector<32x128xbf16>
    %c0_6 = arith.constant 0 : index
    %c0_7 = arith.constant 0 : index
    %13 = vector.load %arg4[%c0_6, %c0_7] : memref<32x128xbf16, #tpu.memory_space<vmem>>, vector<32x128xbf16>
    tpu.vector_store %arg4[%c0_6, %c0_7], %12 {strides = array<i32>} : memref<32x128xbf16, #tpu.memory_space<vmem>>, vector<32x128xbf16>,
    return
  }
  func.func @transform_0(%arg0: i32) -> (i32, i32) {
    %c0_i32 = arith.constant 0 : i32
    %c0_i32_0 = arith.constant 0 : i32
    return %arg0, %c0_i32 : i32, i32
  }
  func.func @transform_1(%arg0: i32) -> (i32, i32) {
    %c0_i32 = arith.constant 0 : i32
    %c0_i32_0 = arith.constant 0 : i32
    %c0_i32_1 = arith.constant 0 : i32
    return %c0_i32, %c0_i32_0 : i32, i32
  }
  func.func @transform_2(%arg0: i32) -> (i32, i32) {
    %c0_i32 = arith.constant 0 : i32
    %c0_i32_0 = arith.constant 0 : i32
    %c0_i32_1 = arith.constant 0 : i32
    return %c0_i32, %c0_i32_0 : i32, i32
  }
  func.func @transform_3(%arg0: i32) -> (i32, i32) {
    %c0_i32 = arith.constant 0 : i32
    %c0_i32_0 = arith.constant 0 : i32
    return %arg0, %c0_i32 : i32, i32
  }
}

module attributes {stable_mosaic.version = 11 : i64} {
  func.func @conv_stats_kernel(%arg0: i32, %arg1: memref<8x256xbf16, #tpu.memory_space<vmem>>, %arg2: memref<256x128xbf16, #tpu.memory_space<vmem>>, %arg3: memref<8x128xf32, #tpu.memory_space<vmem>>, %arg4: memref<8x128xf32, #tpu.memory_space<vmem>>, %arg5: memref<8x128xf32, #tpu.memory_space<vmem>>) attributes {dimension_semantics = [#tpu.dimension_semantics<arbitrary>], iteration_bounds = array<i64: 1>, scalar_prefetch = 0 : i64, scratch_operands = 0 : i64, tpu.core_type = #tpu.core_type<tc>, window_params = [{transform_indices = @transform_0, window_bounds = array<i64: 8, 256>}, {pipeline_mode = #tpu.pipeline_mode<synchronous>, transform_indices = @transform_1, window_bounds = array<i64: 256, 128>}, {transform_indices = @transform_2, window_bounds = array<i64: 8, 128>}, {pipeline_mode = #tpu.pipeline_mode<synchronous>, transform_indices = @transform_3, window_bounds = array<i64: 8, 128>}, {pipeline_mode = #tpu.pipeline_mode<synchronous>, transform_indices = @transform_4, window_bounds = array<i64: 8, 128>}]} {
    %c0 = arith.constant 0 : index
    %c0_0 = arith.constant 0 : index
    %0 = vector.load %arg1[%c0, %c0_0] : memref<8x256xbf16, #tpu.memory_space<vmem>>, vector<8x256xbf16>
    %c0_1 = arith.constant 0 : index
    %c0_2 = arith.constant 0 : index
    %1 = vector.load %arg2[%c0_1, %c0_2] : memref<256x128xbf16, #tpu.memory_space<vmem>>, vector<256x128xbf16>
    %cst = arith.constant dense<0.000000e+00> : vector<8x128xf32>
    %2 = tpu.matmul %0, %1, %cst {dimension_numbers = #tpu.dot_dimension_numbers<[1], [0], [0], [1], [0, 0, 1, 1], [], []>} : vector<8x256xbf16>, vector<256x128xbf16>, vector<8x128xf32> -> vector<8x128xf32>
    %c0_3 = arith.constant 0 : index
    %c0_4 = arith.constant 0 : index
    %3 = vector.load %arg3[%c0_3, %c0_4] : memref<8x128xf32, #tpu.memory_space<vmem>>, vector<8x128xf32>
    tpu.vector_store %arg3[%c0_3, %c0_4], %2 {strides = array<i32>} : memref<8x128xf32, #tpu.memory_space<vmem>>, vector<8x128xf32>,
    %c0_i32 = arith.constant 0 : i32
    %4 = arith.cmpi eq, %arg0, %c0_i32 : i32
    %5 = arith.extui %4 : i1 to i32
    %c0_i32_5 = arith.constant 0 : i32
    %6 = arith.cmpi ne, %5, %c0_i32_5 : i32
    scf.if %6 {
      %cst_16 = arith.constant 0.000000e+00 : f32
      %20 = vector.broadcast %cst_16 : f32 to vector<8x128xf32>
      %c0_17 = arith.constant 0 : index
      %c0_18 = arith.constant 0 : index
      %21 = vector.load %arg4[%c0_17, %c0_18] : memref<8x128xf32, #tpu.memory_space<vmem>>, vector<8x128xf32>
      tpu.vector_store %arg4[%c0_17, %c0_18], %20 {strides = array<i32>} : memref<8x128xf32, #tpu.memory_space<vmem>>, vector<8x128xf32>,
      %cst_19 = arith.constant 0.000000e+00 : f32
      %22 = vector.broadcast %cst_19 : f32 to vector<8x128xf32>
      %c0_20 = arith.constant 0 : index
      %c0_21 = arith.constant 0 : index
      %23 = vector.load %arg5[%c0_20, %c0_21] : memref<8x128xf32, #tpu.memory_space<vmem>>, vector<8x128xf32>
      tpu.vector_store %arg5[%c0_20, %c0_21], %22 {strides = array<i32>} : memref<8x128xf32, #tpu.memory_space<vmem>>, vector<8x128xf32>,
    } else {
    }
    %c0_6 = arith.constant 0 : index
    %c0_7 = arith.constant 0 : index
    %7 = vector.load %arg4[%c0_6, %c0_7] : memref<8x128xf32, #tpu.memory_space<vmem>>, vector<8x128xf32>
    %cst_8 = arith.constant dense<0.000000e+00> : vector<128xf32>
    %8 = vector.multi_reduction <add>, %2, %cst_8 [0] : vector<8x128xf32> to vector<128xf32>
    %9 = vector.shape_cast %8 : vector<128xf32> to vector<1x128xf32>
    %10 = vector.broadcast %9 : vector<1x128xf32> to vector<8x128xf32>
    %11 = arith.addf %7, %10 : vector<8x128xf32>
    %c0_9 = arith.constant 0 : index
    %c0_10 = arith.constant 0 : index
    %12 = vector.load %arg4[%c0_9, %c0_10] : memref<8x128xf32, #tpu.memory_space<vmem>>, vector<8x128xf32>
    tpu.vector_store %arg4[%c0_9, %c0_10], %11 {strides = array<i32>} : memref<8x128xf32, #tpu.memory_space<vmem>>, vector<8x128xf32>,
    %c0_11 = arith.constant 0 : index
    %c0_12 = arith.constant 0 : index
    %13 = vector.load %arg5[%c0_11, %c0_12] : memref<8x128xf32, #tpu.memory_space<vmem>>, vector<8x128xf32>
    %14 = arith.mulf %2, %2 : vector<8x128xf32>
    %cst_13 = arith.constant dense<0.000000e+00> : vector<128xf32>
    %15 = vector.multi_reduction <add>, %14, %cst_13 [0] : vector<8x128xf32> to vector<128xf32>
    %16 = vector.shape_cast %15 : vector<128xf32> to vector<1x128xf32>
    %17 = vector.broadcast %16 : vector<1x128xf32> to vector<8x128xf32>
    %18 = arith.addf %13, %17 : vector<8x128xf32>
    %c0_14 = arith.constant 0 : index
    %c0_15 = arith.constant 0 : index
    %19 = vector.load %arg5[%c0_14, %c0_15] : memref<8x128xf32, #tpu.memory_space<vmem>>, vector<8x128xf32>
    tpu.vector_store %arg5[%c0_14, %c0_15], %18 {strides = array<i32>} : memref<8x128xf32, #tpu.memory_space<vmem>>, vector<8x128xf32>,
    return
  }
  func.func @transform_0(%arg0: i32) -> (i32, i32) {
    %c0_i32 = arith.constant 0 : i32
    %c0_i32_0 = arith.constant 0 : i32
    return %arg0, %c0_i32 : i32, i32
  }
  func.func @transform_1(%arg0: i32) -> (i32, i32) {
    %c0_i32 = arith.constant 0 : i32
    %c0_i32_0 = arith.constant 0 : i32
    %c0_i32_1 = arith.constant 0 : i32
    return %c0_i32, %c0_i32_0 : i32, i32
  }
  func.func @transform_2(%arg0: i32) -> (i32, i32) {
    %c0_i32 = arith.constant 0 : i32
    %c0_i32_0 = arith.constant 0 : i32
    return %arg0, %c0_i32 : i32, i32
  }
  func.func @transform_3(%arg0: i32) -> (i32, i32) {
    %c0_i32 = arith.constant 0 : i32
    %c0_i32_0 = arith.constant 0 : i32
    %c0_i32_1 = arith.constant 0 : i32
    return %c0_i32, %c0_i32_0 : i32, i32
  }
  func.func @transform_4(%arg0: i32) -> (i32, i32) {
    %c0_i32 = arith.constant 0 : i32
    %c0_i32_0 = arith.constant 0 : i32
    %c0_i32_1 = arith.constant 0 : i32
    return %c0_i32, %c0_i32_0 : i32, i32
  }
}

module attributes {stable_mosaic.version = 11 : i64} {
  func.func @bn_lrelu_kernel(%arg0: i32, %arg1: memref<8x128xf32, #tpu.memory_space<vmem>>, %arg2: memref<1x128xf32, #tpu.memory_space<vmem>>, %arg3: memref<1x128xf32, #tpu.memory_space<vmem>>, %arg4: memref<8x128xbf16, #tpu.memory_space<vmem>>) attributes {dimension_semantics = [#tpu.dimension_semantics<parallel>], iteration_bounds = array<i64: 1>, scalar_prefetch = 0 : i64, scratch_operands = 0 : i64, tpu.core_type = #tpu.core_type<tc>, window_params = [{transform_indices = @transform_0, window_bounds = array<i64: 8, 128>}, {pipeline_mode = #tpu.pipeline_mode<synchronous>, transform_indices = @transform_1, window_bounds = array<i64: 1, 128>}, {pipeline_mode = #tpu.pipeline_mode<synchronous>, transform_indices = @transform_2, window_bounds = array<i64: 1, 128>}, {transform_indices = @transform_3, window_bounds = array<i64: 8, 128>}]} {
    %c0 = arith.constant 0 : index
    %c0_0 = arith.constant 0 : index
    %0 = vector.load %arg1[%c0, %c0_0] : memref<8x128xf32, #tpu.memory_space<vmem>>, vector<8x128xf32>
    %c0_1 = arith.constant 0 : index
    %c0_2 = arith.constant 0 : index
    %1 = vector.load %arg2[%c0_1, %c0_2] : memref<1x128xf32, #tpu.memory_space<vmem>>, vector<1x128xf32>
    %2 = vector.broadcast %1 : vector<1x128xf32> to vector<8x128xf32>
    %3 = arith.mulf %0, %2 : vector<8x128xf32>
    %c0_3 = arith.constant 0 : index
    %c0_4 = arith.constant 0 : index
    %4 = vector.load %arg3[%c0_3, %c0_4] : memref<1x128xf32, #tpu.memory_space<vmem>>, vector<1x128xf32>
    %5 = vector.broadcast %4 : vector<1x128xf32> to vector<8x128xf32>
    %6 = arith.addf %3, %5 : vector<8x128xf32>
    %cst = arith.constant 0.000000e+00 : f32
    %7 = vector.broadcast %cst : f32 to vector<8x128xf32>
    %8 = arith.cmpf oge, %6, %7 : vector<8x128xf32>
    %cst_5 = arith.constant 2.000000e-01 : f32
    %9 = vector.broadcast %cst_5 : f32 to vector<8x128xf32>
    %10 = arith.mulf %9, %6 : vector<8x128xf32>
    %11 = arith.select %8, %6, %10 : vector<8x128xi1>, vector<8x128xf32>
    %12 = arith.truncf %11 : vector<8x128xf32> to vector<8x128xbf16>
    %c0_6 = arith.constant 0 : index
    %c0_7 = arith.constant 0 : index
    %13 = vector.load %arg4[%c0_6, %c0_7] : memref<8x128xbf16, #tpu.memory_space<vmem>>, vector<8x128xbf16>
    tpu.vector_store %arg4[%c0_6, %c0_7], %12 {strides = array<i32>} : memref<8x128xbf16, #tpu.memory_space<vmem>>, vector<8x128xbf16>,
    return
  }
  func.func @transform_0(%arg0: i32) -> (i32, i32) {
    %c0_i32 = arith.constant 0 : i32
    %c0_i32_0 = arith.constant 0 : i32
    return %arg0, %c0_i32 : i32, i32
  }
  func.func @transform_1(%arg0: i32) -> (i32, i32) {
    %c0_i32 = arith.constant 0 : i32
    %c0_i32_0 = arith.constant 0 : i32
    %c0_i32_1 = arith.constant 0 : i32
    return %c0_i32, %c0_i32_0 : i32, i32
  }
  func.func @transform_2(%arg0: i32) -> (i32, i32) {
    %c0_i32 = arith.constant 0 : i32
    %c0_i32_0 = arith.constant 0 : i32
    %c0_i32_1 = arith.constant 0 : i32
    return %c0_i32, %c0_i32_0 : i32, i32
  }
  func.func @transform_3(%arg0: i32) -> (i32, i32) {
    %c0_i32 = arith.constant 0 : i32
    %c0_i32_0 = arith.constant 0 : i32
    return %arg0, %c0_i32 : i32, i32
  }
}

module attributes {stable_mosaic.version = 11 : i64} {
  func.func @linear_sigmoid_kernel(%arg0: i32, %arg1: memref<8x128xbf16, #tpu.memory_space<vmem>>, %arg2: memref<128x128xbf16, #tpu.memory_space<vmem>>, %arg3: memref<8x128xf32, #tpu.memory_space<vmem>>) attributes {dimension_semantics = [#tpu.dimension_semantics<arbitrary>], iteration_bounds = array<i64: 1>, scalar_prefetch = 0 : i64, scratch_operands = 0 : i64, tpu.core_type = #tpu.core_type<tc>, window_params = [{transform_indices = @transform_0, window_bounds = array<i64: 8, 128>}, {transform_indices = @transform_1, window_bounds = array<i64: 128, 128>}, {pipeline_mode = #tpu.pipeline_mode<synchronous>, transform_indices = @transform_2, window_bounds = array<i64: 8, 128>}]} {
    %c0_i32 = arith.constant 0 : i32
    %0 = arith.cmpi eq, %arg0, %c0_i32 : i32
    %1 = arith.extui %0 : i1 to i32
    %c0_i32_0 = arith.constant 0 : i32
    %2 = arith.cmpi ne, %1, %c0_i32_0 : i32
    scf.if %2 {
      %cst_10 = arith.constant 0.000000e+00 : f32
      %12 = vector.broadcast %cst_10 : f32 to vector<8x128xf32>
      %c0_11 = arith.constant 0 : index
      %c0_12 = arith.constant 0 : index
      %13 = vector.load %arg3[%c0_11, %c0_12] : memref<8x128xf32, #tpu.memory_space<vmem>>, vector<8x128xf32>
      tpu.vector_store %arg3[%c0_11, %c0_12], %12 {strides = array<i32>} : memref<8x128xf32, #tpu.memory_space<vmem>>, vector<8x128xf32>,
    } else {
    }
    %c0 = arith.constant 0 : index
    %c0_1 = arith.constant 0 : index
    %3 = vector.load %arg3[%c0, %c0_1] : memref<8x128xf32, #tpu.memory_space<vmem>>, vector<8x128xf32>
    %c0_2 = arith.constant 0 : index
    %c0_3 = arith.constant 0 : index
    %4 = vector.load %arg1[%c0_2, %c0_3] : memref<8x128xbf16, #tpu.memory_space<vmem>>, vector<8x128xbf16>
    %c0_4 = arith.constant 0 : index
    %c0_5 = arith.constant 0 : index
    %5 = vector.load %arg2[%c0_4, %c0_5] : memref<128x128xbf16, #tpu.memory_space<vmem>>, vector<128x128xbf16>
    %cst = arith.constant dense<0.000000e+00> : vector<8x128xf32>
    %6 = tpu.matmul %4, %5, %cst {dimension_numbers = #tpu.dot_dimension_numbers<[1], [0], [0], [1], [0, 0, 1, 1], [], []>} : vector<8x128xbf16>, vector<128x128xbf16>, vector<8x128xf32> -> vector<8x128xf32>
    %7 = arith.addf %3, %6 : vector<8x128xf32>
    %c0_6 = arith.constant 0 : index
    %c0_7 = arith.constant 0 : index
    %8 = vector.load %arg3[%c0_6, %c0_7] : memref<8x128xf32, #tpu.memory_space<vmem>>, vector<8x128xf32>
    tpu.vector_store %arg3[%c0_6, %c0_7], %7 {strides = array<i32>} : memref<8x128xf32, #tpu.memory_space<vmem>>, vector<8x128xf32>,
    %c0_i32_8 = arith.constant 0 : i32
    %9 = arith.cmpi eq, %arg0, %c0_i32_8 : i32
    %10 = arith.extui %9 : i1 to i32
    %c0_i32_9 = arith.constant 0 : i32
    %11 = arith.cmpi ne, %10, %c0_i32_9 : i32
    scf.if %11 {
      %c0_10 = arith.constant 0 : index
      %c0_11 = arith.constant 0 : index
      %12 = vector.load %arg3[%c0_10, %c0_11] : memref<8x128xf32, #tpu.memory_space<vmem>>, vector<8x128xf32>
      %13 = arith.negf %12 : vector<8x128xf32>
      %14 = math.exp %13 : vector<8x128xf32>
      %cst_12 = arith.constant 1.000000e+00 : f32
      %15 = vector.broadcast %cst_12 : f32 to vector<8x128xf32>
      %16 = arith.addf %15, %14 : vector<8x128xf32>
      %17 = arith.divf %15, %16 : vector<8x128xf32>
      %c0_13 = arith.constant 0 : index
      %c0_14 = arith.constant 0 : index
      %18 = vector.load %arg3[%c0_13, %c0_14] : memref<8x128xf32, #tpu.memory_space<vmem>>, vector<8x128xf32>
      tpu.vector_store %arg3[%c0_13, %c0_14], %17 {strides = array<i32>} : memref<8x128xf32, #tpu.memory_space<vmem>>, vector<8x128xf32>,
    } else {
    }
    return
  }
  func.func @transform_0(%arg0: i32) -> (i32, i32) {
    %c0_i32 = arith.constant 0 : i32
    %c0_i32_0 = arith.constant 0 : i32
    return %c0_i32, %arg0 : i32, i32
  }
  func.func @transform_1(%arg0: i32) -> (i32, i32) {
    %c0_i32 = arith.constant 0 : i32
    %c0_i32_0 = arith.constant 0 : i32
    return %arg0, %c0_i32 : i32, i32
  }
  func.func @transform_2(%arg0: i32) -> (i32, i32) {
    %c0_i32 = arith.constant 0 : i32
    %c0_i32_0 = arith.constant 0 : i32
    %c0_i32_1 = arith.constant 0 : i32
    return %c0_i32, %c0_i32_0 : i32, i32
  }
}

</mosaic_0001>

<llo_original>
// kernel: discriminator_forward.6
$region0: #{discriminator_forward.6}
  #allocation0 [shape = 'u32[]', space=smem, size = 0x4, offset = 0x4, fixed_abs, tag = 'smem constant byte address 0x4 - core index']
  #allocation1 [shape = 'u32[144,128]{1,0:T(1,128)}', space=vmem, size = 0x12000, scoped, tag = 'internal scratch']
  %s0 = inlined_call_operand.vmem [shape: bf16[128,64], index: 0, kind: input, shape index: {}]
  %s1 = inlined_call_operand.vmem [shape: bf16[64,128], index: 1, kind: input, shape index: {}]
  %s2 = inlined_call_operand.vmem [shape: bf16[128,128], index: 2, kind: output, shape index: {}]
  %s3 = sld [smem:[#allocation0]]
  $region18: #{discriminator_forward.6} parent=0
    _
  %s5 = ssub.s32 1, %s3
  %s6 = scalar_select 0, %s5, %s3
  // Predicated region
  $region2: #{discriminator_forward.6} parent=0 // pred_check
    _
  $region3: #{discriminator_forward.6} parent=0 // pred_check_branch
    %8 = sbr.rel (0) target = $region5
  $region4: #{discriminator_forward.6} parent=0 // pred_region
    _
  $region5: #{discriminator_forward.6} parent=0 // pred_fallthru
    _
  // Predicated region
  $region6: #{discriminator_forward.6} parent=0 // pred_check
    _
  $region7: #{discriminator_forward.6} parent=0 // pred_check_branch
    %10 = sbr.rel (0) target = $region9
  $region8: #{discriminator_forward.6} parent=0 // pred_region
    _
  $region9: #{discriminator_forward.6} parent=0 // pred_fallthru
    _
  %v12 = vld [vmem:[%s0] sm:$0xf]
  %v13 = vld [vmem:[%s0 + $0x4] sm:$0xf]
  %v14 = vld [vmem:[%s0 + $0x8] sm:$0xf]
  %v15 = vld [vmem:[%s0 + $0xc] sm:$0xf]
  %v16 = vld [vmem:[%s0 + $0x10] sm:$0xf]
  %v17 = vld [vmem:[%s0 + $0x14] sm:$0xf]
  %v18 = vld [vmem:[%s0 + $0x18] sm:$0xf]
  %v19 = vld [vmem:[%s0 + $0x1c] sm:$0xf]
  %v20 = vld [vmem:[%s0 + $0x20] sm:$0xf]
  %v21 = vld [vmem:[%s0 + $0x24] sm:$0xf]
  %v22 = vld [vmem:[%s0 + $0x28] sm:$0xf]
  %v23 = vld [vmem:[%s0 + $0x2c] sm:$0xf]
  %v24 = vld [vmem:[%s0 + $0x30] sm:$0xf]
  %v25 = vld [vmem:[%s0 + $0x34] sm:$0xf]
  %v26 = vld [vmem:[%s0 + $0x38] sm:$0xf]
  %v27 = vld [vmem:[%s0 + $0x3c] sm:$0xf]
  %v28 = vld [vmem:[%s1] sm:$0xf]
  %v29 = vld [vmem:[%s1 + $0x4] sm:$0xf]
  %v30 = vld [vmem:[%s1 + $0x8] sm:$0xf]
  %v31 = vld [vmem:[%s1 + $0xc] sm:$0xf]
  %v32 = vld [vmem:[%s1 + $0x10] sm:$0xf]
  %v33 = vld [vmem:[%s1 + $0x14] sm:$0xf]
  %v34 = vld [vmem:[%s1 + $0x18] sm:$0xf]
  %v35 = vld [vmem:[%s1 + $0x1c] sm:$0xf]
  %v52 = vunpack.c.l.b16 %v12
  %v53 = vunpack.c.l.b16 %v13
  %v54 = vunpack.c.l.b16 %v14
  %v55 = vunpack.c.l.b16 %v15
  %v56 = vunpack.c.l.b16 %v16
  %v57 = vunpack.c.l.b16 %v17
  %v58 = vunpack.c.l.b16 %v18
  %v59 = vunpack.c.l.b16 %v19
  %v60 = vunpack.c.l.b16 %v20
  %v61 = vunpack.c.l.b16 %v21
  %v62 = vunpack.c.l.b16 %v22
  %v63 = vunpack.c.l.b16 %v23
  %v64 = vunpack.c.l.b16 %v24
  %v65 = vunpack.c.l.b16 %v25
  %v66 = vunpack.c.l.b16 %v26
  %v67 = vunpack.c.l.b16 %v27
  %v68 = vpack.c.b16 %v53, %v52
  %v69 = vpack.c.b16 %v55, %v54
  %v70 = vpack.c.b16 %v57, %v56
  %v71 = vpack.c.b16 %v59, %v58
  %v72 = vpack.c.b16 %v61, %v60
  %v73 = vpack.c.b16 %v63, %v62
  %v74 = vpack.c.b16 %v65, %v64
  %v75 = vpack.c.b16 %v67, %v66
  %v84 = vunpack.c.l.b16 %v28
  %v85 = vunpack.c.l.b16 %v29
  %v86 = vunpack.c.l.b16 %v30
  %v87 = vunpack.c.l.b16 %v31
  %v88 = vunpack.c.l.b16 %v32
  %v89 = vunpack.c.l.b16 %v33
  %v90 = vunpack.c.l.b16 %v34
  %v91 = vunpack.c.l.b16 %v35
  %v92 = vpack.c.b16 %v85, %v84
  %v93 = vpack.c.b16 %v87, %v86
  %v94 = vpack.c.b16 %v89, %v88
  %v95 = vpack.c.b16 %v91, %v90
  %vm100 = vcmask 523264
  %v102 = vsel %vm100, %v68, 0
  %v105 = vsel %vm100, %v69, 0
  %v108 = vsel %vm100, %v70, 0
  %v111 = vsel %vm100, %v71, 0
  %v114 = vsel %vm100, %v72, 0
  %v117 = vsel %vm100, %v73, 0
  %v120 = vsel %vm100, %v74, 0
  %v123 = vsel %vm100, %v75, 0
  %125 = vmatprep.subr.bf16.mxu0 0
  %126 = vmatpush1.bf16.msra.mxu0 %v92
  %127 = vmatprep.subr.bf16.mxu0 0
  %128 = vmatpush1.bf16.msra.mxu0 %v93
  %129 = vmatprep.subr.bf16.mxu0 0
  %130 = vmatpush1.bf16.msra.mxu0 %v94
  %131 = vmatprep.subr.bf16.mxu0 0
  %132 = vmatpush1.bf16.msra.mxu0 %v95
  %133 = vmatprep.subr.bf16.mxu0 0
  %134 = vmatpush1.bf16.msra.mxu0 0
  %135 = vmatprep.subr.bf16.mxu0 0
  %136 = vmatpush1.bf16.msra.mxu0 0
  %137 = vmatprep.subr.bf16.mxu0 0
  %138 = vmatpush1.bf16.msra.mxu0 0
  %139 = vmatprep.subr.bf16.mxu0 0
  %140 = vmatpush1.bf16.msra.mxu0 0
  %141 = vmatprep.subr.bf16.mxu0 0
  %142 = vmatpush1.bf16.msra.mxu0 0
  %143 = vmatprep.subr.bf16.mxu0 0
  %144 = vmatpush1.bf16.msra.mxu0 0
  %145 = vmatprep.subr.bf16.mxu0 0
  %146 = vmatpush1.bf16.msra.mxu0 0
  %147 = vmatprep.subr.bf16.mxu0 0
  %148 = vmatpush1.bf16.msra.mxu0 0
  %149 = vmatprep.subr.bf16.mxu0 0
  %150 = vmatpush1.bf16.msra.mxu0 0
  %151 = vmatprep.subr.bf16.mxu0 0
  %152 = vmatpush1.bf16.msra.mxu0 0
  %153 = vmatprep.subr.bf16.mxu0 0
  %154 = vmatpush1.bf16.msra.mxu0 0
  %155 = vmatprep.subr.bf16.mxu0 0
  %156 = vmatpush1.bf16.msra.mxu0 0
  %157 = vmatprep.mubr.bf16.mxu0 0
  %158 = vmatmul.mubr.bf16.gmra.mrb[0].mxu0 %v102
  %v159 = vpop.f32.mrb[0].mxu0
  %v160 = vadd.f32 0.0, %v159
  %v161 = vpop.f32.mrb[0].mxu0
  %v162 = vpop.f32.mrb[0].mxu0
  %v163 = vadd.f32 0.0, %v162
  %v164 = vpop.f32.mrb[0].mxu0
  %165 = vmatprep.mubr.bf16.mxu0 0
  %166 = vmatmul.mubr.bf16.gmra.mrb[0].mxu0 %v105
  %v167 = vpop.f32.mrb[0].mxu0
  %v168 = vadd.f32 0.0, %v167
  %v169 = vpop.f32.mrb[0].mxu0
  %v170 = vpop.f32.mrb[0].mxu0
  %v171 = vadd.f32 0.0, %v170
  %v172 = vpop.f32.mrb[0].mxu0
  %173 = vmatprep.mubr.bf16.mxu0 0
  %174 = vmatmul.mubr.bf16.gmra.mrb[0].mxu0 %v108
  %v175 = vpop.f32.mrb[0].mxu0
  %v176 = vadd.f32 0.0, %v175
  %v177 = vpop.f32.mrb[0].mxu0
  %v178 = vpop.f32.mrb[0].mxu0
  %v179 = vadd.f32 0.0, %v178
  %v180 = vpop.f32.mrb[0].mxu0
  %181 = vmatprep.mubr.bf16.mxu0 0
  %182 = vmatmul.mubr.bf16.gmra.mrb[0].mxu0 %v111
  %v183 = vpop.f32.mrb[0].mxu0
  %v184 = vadd.f32 0.0, %v183
  %v185 = vpop.f32.mrb[0].mxu0
  %v186 = vpop.f32.mrb[0].mxu0
  %v187 = vadd.f32 0.0, %v186
  %v188 = vpop.f32.mrb[0].mxu0
  %189 = vmatprep.mubr.bf16.mxu0 0
  %190 = vmatmul.mubr.bf16.gmra.mrb[0].mxu0 %v114
  %v191 = vpop.f32.mrb[0].mxu0
  %v192 = vadd.f32 0.0, %v191
  %v193 = vpop.f32.mrb[0].mxu0
  %v194 = vpop.f32.mrb[0].mxu0
  %v195 = vadd.f32 0.0, %v194
  %v196 = vpop.f32.mrb[0].mxu0
  %197 = vmatprep.mubr.bf16.mxu0 0
  %198 = vmatmul.mubr.bf16.gmra.mrb[0].mxu0 %v117
  %v199 = vpop.f32.mrb[0].mxu0
  %v200 = vadd.f32 0.0, %v199
  %v201 = vpop.f32.mrb[0].mxu0
  %v202 = vpop.f32.mrb[0].mxu0
  %v203 = vadd.f32 0.0, %v202
  %v204 = vpop.f32.mrb[0].mxu0
  %205 = vmatprep.mubr.bf16.mxu0 0
  %206 = vmatmul.mubr.bf16.gmra.mrb[0].mxu0 %v120
  %v207 = vpop.f32.mrb[0].mxu0
  %v208 = vadd.f32 0.0, %v207
  %v209 = vpop.f32.mrb[0].mxu0
  %v210 = vpop.f32.mrb[0].mxu0
  %v211 = vadd.f32 0.0, %v210
  %v212 = vpop.f32.mrb[0].mxu0
  %213 = vmatprep.mubr.bf16.mxu0 0
  %214 = vmatmul.mubr.bf16.gmra.mrb[0].mxu0 %v123
  %v215 = vpop.f32.mrb[0].mxu0
  %v216 = vadd.f32 0.0, %v215
  %v217 = vpop.f32.mrb[0].mxu0
  %v218 = vpop.f32.mrb[0].mxu0
  %v219 = vadd.f32 0.0, %v218
  %v220 = vpop.f32.mrb[0].mxu0
  %221 = vdwg.mxu0
  %vm222 = vcmp.ge.f32.partialorder %v160, 0.0
  %vm223 = vcmp.ge.f32.partialorder %v163, 0.0
  %vm224 = vcmp.ge.f32.partialorder %v168, 0.0
  %vm225 = vcmp.ge.f32.partialorder %v171, 0.0
  %vm226 = vcmp.ge.f32.partialorder %v176, 0.0
  %vm227 = vcmp.ge.f32.partialorder %v179, 0.0
  %vm228 = vcmp.ge.f32.partialorder %v184, 0.0
  %vm229 = vcmp.ge.f32.partialorder %v187, 0.0
  %vm230 = vcmp.ge.f32.partialorder %v192, 0.0
  %vm231 = vcmp.ge.f32.partialorder %v195, 0.0
  %vm232 = vcmp.ge.f32.partialorder %v200, 0.0
  %vm233 = vcmp.ge.f32.partialorder %v203, 0.0
  %vm234 = vcmp.ge.f32.partialorder %v208, 0.0
  %vm235 = vcmp.ge.f32.partialorder %v211, 0.0
  %vm236 = vcmp.ge.f32.partialorder %v216, 0.0
  %vm237 = vcmp.ge.f32.partialorder %v219, 0.0
  %v238 = vmul.f32 %v160, 0.2
  %v239 = vmul.f32 %v163, 0.2
  %v240 = vmul.f32 %v168, 0.2
  %v241 = vmul.f32 %v171, 0.2
  %v242 = vmul.f32 %v176, 0.2
  %v243 = vmul.f32 %v179, 0.2
  %v244 = vmul.f32 %v184, 0.2
  %v245 = vmul.f32 %v187, 0.2
  %v246 = vmul.f32 %v192, 0.2
  %v247 = vmul.f32 %v195, 0.2
  %v248 = vmul.f32 %v200, 0.2
  %v249 = vmul.f32 %v203, 0.2
  %v250 = vmul.f32 %v208, 0.2
  %v251 = vmul.f32 %v211, 0.2
  %v252 = vmul.f32 %v216, 0.2
  %v253 = vmul.f32 %v219, 0.2
  %v254 = vsel %vm222, %v160, %v238
  %v255 = vsel %vm223, %v163, %v239
  %v256 = vsel %vm224, %v168, %v240
  %v257 = vsel %vm225, %v171, %v241
  %v258 = vsel %vm226, %v176, %v242
  %v259 = vsel %vm227, %v179, %v243
  %v260 = vsel %vm228, %v184, %v244
  %v261 = vsel %vm229, %v187, %v245
  %v262 = vsel %vm230, %v192, %v246
  %v263 = vsel %vm231, %v195, %v247
  %v264 = vsel %vm232, %v200, %v248
  %v265 = vsel %vm233, %v203, %v249
  %v266 = vsel %vm234, %v208, %v250
  %v267 = vsel %vm235, %v211, %v251
  %v268 = vsel %vm236, %v216, %v252
  %v269 = vsel %vm237, %v219, %v253
  %v270 = vpack.c.bf16 %v255, %v254
  %v271 = vpack.c.bf16 %v257, %v256
  %v272 = vpack.c.bf16 %v259, %v258
  %v273 = vpack.c.bf16 %v261, %v260
  %v274 = vpack.c.bf16 %v263, %v262
  %v275 = vpack.c.bf16 %v265, %v264
  %v276 = vpack.c.bf16 %v267, %v266
  %v277 = vpack.c.bf16 %v269, %v268
  %v286 = vunpack.c.l.b16 %v270
  %v287 = vunpack.c.h.b16 %v270
  %v288 = vunpack.c.l.b16 %v271
  %v289 = vunpack.c.h.b16 %v271
  %v290 = vunpack.c.l.b16 %v272
  %v291 = vunpack.c.h.b16 %v272
  %v292 = vunpack.c.l.b16 %v273
  %v293 = vunpack.c.h.b16 %v273
  %v294 = vunpack.c.l.b16 %v274
  %v295 = vunpack.c.h.b16 %v274
  %v296 = vunpack.c.l.b16 %v275
  %v297 = vunpack.c.h.b16 %v275
  %v298 = vunpack.c.l.b16 %v276
  %v299 = vunpack.c.h.b16 %v276
  %v300 = vunpack.c.l.b16 %v277
  %v301 = vunpack.c.h.b16 %v277
  %v302 = vpack.c.b16 %v286, %v286
  %v303 = vpack.c.b16 %v287, %v287
  %v304 = vpack.c.b16 %v288, %v288
  %v305 = vpack.c.b16 %v289, %v289
  %v306 = vpack.c.b16 %v290, %v290
  %v307 = vpack.c.b16 %v291, %v291
  %v308 = vpack.c.b16 %v292, %v292
  %v309 = vpack.c.b16 %v293, %v293
  %v310 = vpack.c.b16 %v294, %v294
  %v311 = vpack.c.b16 %v295, %v295
  %v312 = vpack.c.b16 %v296, %v296
  %v313 = vpack.c.b16 %v297, %v297
  %v314 = vpack.c.b16 %v298, %v298
  %v315 = vpack.c.b16 %v299, %v299
  %v316 = vpack.c.b16 %v300, %v300
  %v317 = vpack.c.b16 %v301, %v301
  %334 = vst [vmem:[%s2] sm:$0xf] %v302
  %335 = vst [vmem:[%s2 + $0x4] sm:$0xf] %v303
  %336 = vst [vmem:[%s2 + $0x8] sm:$0xf] %v304
  %337 = vst [vmem:[%s2 + $0xc] sm:$0xf] %v305
  %338 = vst [vmem:[%s2 + $0x10] sm:$0xf] %v306
  %339 = vst [vmem:[%s2 + $0x14] sm:$0xf] %v307
  %340 = vst [vmem:[%s2 + $0x18] sm:$0xf] %v308
  %341 = vst [vmem:[%s2 + $0x1c] sm:$0xf] %v309
  %342 = vst [vmem:[%s2 + $0x20] sm:$0xf] %v310
  %343 = vst [vmem:[%s2 + $0x24] sm:$0xf] %v311
  %344 = vst [vmem:[%s2 + $0x28] sm:$0xf] %v312
  %345 = vst [vmem:[%s2 + $0x2c] sm:$0xf] %v313
  %346 = vst [vmem:[%s2 + $0x30] sm:$0xf] %v314
  %347 = vst [vmem:[%s2 + $0x34] sm:$0xf] %v315
  %348 = vst [vmem:[%s2 + $0x38] sm:$0xf] %v316
  %349 = vst [vmem:[%s2 + $0x3c] sm:$0xf] %v317
  // Predicated region
  $region10: #{discriminator_forward.6} parent=0 // pred_check
    _
  $region11: #{discriminator_forward.6} parent=0 // pred_check_branch
    %351 = sbr.rel (0) target = $region13
  $region12: #{discriminator_forward.6} parent=0 // pred_region
    _
  $region13: #{discriminator_forward.6} parent=0 // pred_fallthru
    _
  // Predicated region
  $region14: #{discriminator_forward.6} parent=0 // pred_check
    _
  $region15: #{discriminator_forward.6} parent=0 // pred_check_branch
    %353 = sbr.rel (0) target = $region17
  $region16: #{discriminator_forward.6} parent=0 // pred_region
    _
  $region17: #{discriminator_forward.6} parent=0 // pred_fallthru
    _

// kernel: discriminator_forward.7
$region0: #{discriminator_forward.7}
  #allocation0 [shape = 'u32[]', space=smem, size = 0x4, offset = 0x4, fixed_abs, tag = 'smem constant byte address 0x4 - core index']
  #allocation1 [shape = 'u32[144,128]{1,0:T(1,128)}', space=vmem, size = 0x12000, scoped, tag = 'internal scratch']
  %s0 = inlined_call_operand.vmem [shape: bf16[32,128], index: 0, kind: input, shape index: {}]
  %s1 = inlined_call_operand.vmem [shape: bf16[128,128], index: 1, kind: input, shape index: {}]
  %s2 = inlined_call_operand.vmem [shape: f32[32,128], index: 2, kind: output, shape index: {0}]
  %s3 = inlined_call_operand.vmem [shape: f32[8,128], index: 3, kind: output, shape index: {1}]
  %s4 = inlined_call_operand.vmem [shape: f32[8,128], index: 4, kind: output, shape index: {2}]
  %5 = xla_tuple %s2, %s3, %s4
  %s6 = sld [smem:[#allocation0]]
  $region38: #{discriminator_forward.7} parent=0
    _
  %s8 = ssub.s32 1, %s6
  %s9 = scalar_select 0, %s8, %s6
  // Predicated region
  $region2: #{discriminator_forward.7} parent=0 // pred_check
    _
  $region3: #{discriminator_forward.7} parent=0 // pred_check_branch
    %11 = sbr.rel (0) target = $region5
  $region4: #{discriminator_forward.7} parent=0 // pred_region
    _
  $region5: #{discriminator_forward.7} parent=0 // pred_fallthru
    _
  // Predicated region
  $region6: #{discriminator_forward.7} parent=0 // pred_check
    _
  $region7: #{discriminator_forward.7} parent=0 // pred_check_branch
    %13 = sbr.rel (0) target = $region9
  $region8: #{discriminator_forward.7} parent=0 // pred_region
    _
  $region9: #{discriminator_forward.7} parent=0 // pred_fallthru
    _
  %v15 = vld [vmem:[%s0] sm:$0xf]
  %v16 = vld [vmem:[%s0 + $0x4] sm:$0xf]
  %v17 = vld [vmem:[%s0 + $0x8] sm:$0xf]
  %v18 = vld [vmem:[%s0 + $0xc] sm:$0xf]
  %v19 = vld [vmem:[%s1] sm:$0xf]
  %v20 = vld [vmem:[%s1 + $0x4] sm:$0xf]
  %v21 = vld [vmem:[%s1 + $0x8] sm:$0xf]
  %v22 = vld [vmem:[%s1 + $0xc] sm:$0xf]
  %v23 = vld [vmem:[%s1 + $0x10] sm:$0xf]
  %v24 = vld [vmem:[%s1 + $0x14] sm:$0xf]
  %v25 = vld [vmem:[%s1 + $0x18] sm:$0xf]
  %v26 = vld [vmem:[%s1 + $0x1c] sm:$0xf]
  %v27 = vld [vmem:[%s1 + $0x20] sm:$0xf]
  %v28 = vld [vmem:[%s1 + $0x24] sm:$0xf]
  %v29 = vld [vmem:[%s1 + $0x28] sm:$0xf]
  %v30 = vld [vmem:[%s1 + $0x2c] sm:$0xf]
  %v31 = vld [vmem:[%s1 + $0x30] sm:$0xf]
  %v32 = vld [vmem:[%s1 + $0x34] sm:$0xf]
  %v33 = vld [vmem:[%s1 + $0x38] sm:$0xf]
  %v34 = vld [vmem:[%s1 + $0x3c] sm:$0xf]
  %v39 = vunpack.c.l.b16 %v15
  %v40 = vunpack.c.l.b16 %v16
  %v41 = vunpack.c.l.b16 %v17
  %v42 = vunpack.c.l.b16 %v18
  %v43 = vpack.c.b16 %v40, %v39
  %v44 = vpack.c.b16 %v42, %v41
  %v63 = vunpack.c.l.b16 %v19
  %v64 = vunpack.c.l.b16 %v20
  %v65 = vunpack.c.l.b16 %v21
  %v66 = vunpack.c.l.b16 %v22
  %v67 = vunpack.c.l.b16 %v23
  %v68 = vunpack.c.l.b16 %v24
  %v69 = vunpack.c.l.b16 %v25
  %v70 = vunpack.c.l.b16 %v26
  %v71 = vunpack.c.l.b16 %v27
  %v72 = vunpack.c.l.b16 %v28
  %v73 = vunpack.c.l.b16 %v29
  %v74 = vunpack.c.l.b16 %v30
  %v75 = vunpack.c.l.b16 %v31
  %v76 = vunpack.c.l.b16 %v32
  %v77 = vunpack.c.l.b16 %v33
  %v78 = vunpack.c.l.b16 %v34
  %v79 = vpack.c.b16 %v64, %v63
  %v80 = vpack.c.b16 %v66, %v65
  %v81 = vpack.c.b16 %v68, %v67
  %v82 = vpack.c.b16 %v70, %v69
  %v83 = vpack.c.b16 %v72, %v71
  %v84 = vpack.c.b16 %v74, %v73
  %v85 = vpack.c.b16 %v76, %v75
  %v86 = vpack.c.b16 %v78, %v77
  %95 = vmatprep.subr.bf16.mxu0 0
  %96 = vmatpush1.bf16.msra.mxu0 %v79
  %97 = vmatprep.subr.bf16.mxu0 0
  %98 = vmatpush1.bf16.msra.mxu0 %v80
  %99 = vmatprep.subr.bf16.mxu0 0
  %100 = vmatpush1.bf16.msra.mxu0 %v81
  %101 = vmatprep.subr.bf16.mxu0 0
  %102 = vmatpush1.bf16.msra.mxu0 %v82
  %103 = vmatprep.subr.bf16.mxu0 0
  %104 = vmatpush1.bf16.msra.mxu0 %v83
  %105 = vmatprep.subr.bf16.mxu0 0
  %106 = vmatpush1.bf16.msra.mxu0 %v84
  %107 = vmatprep.subr.bf16.mxu0 0
  %108 = vmatpush1.bf16.msra.mxu0 %v85
  %109 = vmatprep.subr.bf16.mxu0 0
  %110 = vmatpush1.bf16.msra.mxu0 %v86
  %111 = vmatprep.subr.bf16.mxu0 0
  %112 = vmatpush1.bf16.msra.mxu0 0
  %113 = vmatprep.subr.bf16.mxu0 0
  %114 = vmatpush1.bf16.msra.mxu0 0
  %115 = vmatprep.subr.bf16.mxu0 0
  %116 = vmatpush1.bf16.msra.mxu0 0
  %117 = vmatprep.subr.bf16.mxu0 0
  %118 = vmatpush1.bf16.msra.mxu0 0
  %119 = vmatprep.subr.bf16.mxu0 0
  %120 = vmatpush1.bf16.msra.mxu0 0
  %121 = vmatprep.subr.bf16.mxu0 0
  %122 = vmatpush1.bf16.msra.mxu0 0
  %123 = vmatprep.subr.bf16.mxu0 0
  %124 = vmatpush1.bf16.msra.mxu0 0
  %125 = vmatprep.subr.bf16.mxu0 0
  %126 = vmatpush1.bf16.msra.mxu0 0
  %127 = vmatprep.mubr.bf16.mxu0 0
  %128 = vmatmul.mubr.bf16.gmra.mrb[0].mxu0 %v43
  %v129 = vpop.f32.mrb[0].mxu0
  %v130 = vadd.f32 0.0, %v129
  %v131 = vpop.f32.mrb[0].mxu0
  %v132 = vpop.f32.mrb[0].mxu0
  %v133 = vadd.f32 0.0, %v132
  %v134 = vpop.f32.mrb[0].mxu0
  %135 = vmatprep.mubr.bf16.mxu0 0
  %136 = vmatmul.mubr.bf16.gmra.mrb[0].mxu0 %v44
  %v137 = vpop.f32.mrb[0].mxu0
  %v138 = vadd.f32 0.0, %v137
  %v139 = vpop.f32.mrb[0].mxu0
  %v140 = vpop.f32.mrb[0].mxu0
  %v141 = vadd.f32 0.0, %v140
  %v142 = vpop.f32.mrb[0].mxu0
  %143 = vdwg.mxu0
  %144 = vst [vmem:[%s2] sm:$0xff] %v130
  %145 = vst [vmem:[%s2 + $0x8] sm:$0xff] %v133
  %146 = vst [vmem:[%s2 + $0x10] sm:$0xff] %v138
  %147 = vst [vmem:[%s2 + $0x18] sm:$0xff] %v141
  %p148 = scmp.eq.s32.totalorder 0, 0
  // Predicated region
  $region10: #{discriminator_forward.7} parent=0 // pred_check
    %p149 = pneg %p148
  $region11: #{discriminator_forward.7} parent=0 // pred_check_branch
    %151 = sbr.rel (%p149) target = $region13
  $region12: #{discriminator_forward.7} parent=0 // pred_region
    %152 = vst [vmem:[%s3] sm:$0xff] 0.0
    %153 = vst [vmem:[%s4] sm:$0xff] 0.0
  $region13: #{discriminator_forward.7} parent=0 // pred_fallthru
    _
  %v154 = vld [vmem:[%s3] sm:$0xff]
  %v155 = vadd.f32 %v130, %v133
  %v156 = vadd.f32 %v155, %v138
  %v157 = vadd.f32 %v156, %v141
  %v158 = vrot.slane %v157, 4
  %v159 = vadd.f32 %v157, %v158
  %v160 = vrot.slane %v159, 2
  %v161 = vadd.f32 %v159, %v160
  %v162 = vrot.slane %v161, 1
  %v163 = vadd.f32 %v161, %v162
  %v164 = vadd.f32 %v154, %v163
  %165 = vst [vmem:[%s3] sm:$0xff] %v164
  %v166 = vld [vmem:[%s4] sm:$0xff]
  %v167 = vmul.f32 %v130, %v130
  %v168 = vmul.f32 %v133, %v133
  %v169 = vmul.f32 %v138, %v138
  %v170 = vmul.f32 %v141, %v141
  %v171 = vadd.f32 %v167, %v168
  %v172 = vadd.f32 %v171, %v169
  %v173 = vadd.f32 %v172, %v170
  %v174 = vrot.slane %v173, 4
  %v175 = vadd.f32 %v173, %v174
  %v176 = vrot.slane %v175, 2
  %v177 = vadd.f32 %v175, %v176
  %v178 = vrot.slane %v177, 1
  %v179 = vadd.f32 %v177, %v178
  %v180 = vadd.f32 %v166, %v179
  %181 = vst [vmem:[%s4] sm:$0xff] %v180
  // Predicated region
  $region14: #{discriminator_forward.7} parent=0 // pred_check
    _
  $region15: #{discriminator_forward.7} parent=0 // pred_check_branch
    %183 = sbr.rel (0) target = $region17
  $region16: #{discriminator_forward.7} parent=0 // pred_region
    _
  $region17: #{discriminator_forward.7} parent=0 // pred_fallthru
    _
  // Predicated region
  $region18: #{discriminator_forward.7} parent=0 // pred_check
    _
  $region19: #{discriminator_forward.7} parent=0 // pred_check_branch
    %185 = sbr.rel (0) target = $region21
  $region20: #{discriminator_forward.7} parent=0 // pred_region
    _
  $region21: #{discriminator_forward.7} parent=0 // pred_fallthru
    _
  // Predicated region
  $region22: #{discriminator_forward.7} parent=0 // pred_check
    _
  $region23: #{discriminator_forward.7} parent=0 // pred_check_branch
    %187 = sbr.rel (0) target = $region25
  $region24: #{discriminator_forward.7} parent=0 // pred_region
    _
  $region25: #{discriminator_forward.7} parent=0 // pred_fallthru
    _
  // Predicated region
  $region26: #{discriminator_forward.7} parent=0 // pred_check
    _
  $region27: #{discriminator_forward.7} parent=0 // pred_check_branch
    %189 = sbr.rel (0) target = $region29
  $region28: #{discriminator_forward.7} parent=0 // pred_region
    _
  $region29: #{discriminator_forward.7} parent=0 // pred_fallthru
    _
  // Predicated region
  $region30: #{discriminator_forward.7} parent=0 // pred_check
    _
  $region31: #{discriminator_forward.7} parent=0 // pred_check_branch
    %191 = sbr.rel (0) target = $region33
  $region32: #{discriminator_forward.7} parent=0 // pred_region
    _
  $region33: #{discriminator_forward.7} parent=0 // pred_fallthru
    _
  // Predicated region
  $region34: #{discriminator_forward.7} parent=0 // pred_check
    _
  $region35: #{discriminator_forward.7} parent=0 // pred_check_branch
    %193 = sbr.rel (0) target = $region37
  $region36: #{discriminator_forward.7} parent=0 // pred_region
    _
  $region37: #{discriminator_forward.7} parent=0 // pred_fallthru
    _

// kernel: discriminator_forward.8
$region0: #{discriminator_forward.8}
  #allocation0 [shape = 'u32[]', space=smem, size = 0x4, offset = 0x4, fixed_abs, tag = 'smem constant byte address 0x4 - core index']
  #allocation1 [shape = 'u32[144,128]{1,0:T(1,128)}', space=vmem, size = 0x12000, scoped, tag = 'internal scratch']
  %s0 = inlined_call_operand.vmem [shape: f32[32,128], index: 0, kind: input, shape index: {}]
  %s1 = inlined_call_operand.vmem [shape: f32[1,128], index: 1, kind: input, shape index: {}]
  %s2 = inlined_call_operand.vmem [shape: f32[1,128], index: 2, kind: input, shape index: {}]
  %s3 = inlined_call_operand.vmem [shape: bf16[32,128], index: 3, kind: output, shape index: {}]
  %s4 = sld [smem:[#allocation0]]
  $region22: #{discriminator_forward.8} parent=0
    _
  %s6 = ssub.s32 1, %s4
  %s7 = scalar_select 0, %s6, %s4
  // Predicated region
  $region2: #{discriminator_forward.8} parent=0 // pred_check
    _
  $region3: #{discriminator_forward.8} parent=0 // pred_check_branch
    %9 = sbr.rel (0) target = $region5
  $region4: #{discriminator_forward.8} parent=0 // pred_region
    _
  $region5: #{discriminator_forward.8} parent=0 // pred_fallthru
    _
  // Predicated region
  $region6: #{discriminator_forward.8} parent=0 // pred_check
    _
  $region7: #{discriminator_forward.8} parent=0 // pred_check_branch
    %11 = sbr.rel (0) target = $region9
  $region8: #{discriminator_forward.8} parent=0 // pred_region
    _
  $region9: #{discriminator_forward.8} parent=0 // pred_fallthru
    _
  // Predicated region
  $region10: #{discriminator_forward.8} parent=0 // pred_check
    _
  $region11: #{discriminator_forward.8} parent=0 // pred_check_branch
    %13 = sbr.rel (0) target = $region13
  $region12: #{discriminator_forward.8} parent=0 // pred_region
    _
  $region13: #{discriminator_forward.8} parent=0 // pred_fallthru
    _
  %v14 = vld [vmem:[%s0] sm:$0xff]
  %v15 = vld [vmem:[%s0 + $0x8] sm:$0xff]
  %v16 = vld [vmem:[%s0 + $0x10] sm:$0xff]
  %v17 = vld [vmem:[%s0 + $0x18] sm:$0xff]
  %v18 = vld [vmem:[%s1] sm:$0x1]
  %v20 = vlaneseq
  %v21 = vshrl.u32 %v20, 7
  %v22 = vsub.s32 0, %v21
  %v23 = vrot.slane %v18, %v22
  %v25 = vmul.f32 %v14, %v23
  %v26 = vmul.f32 %v15, %v23
  %v27 = vmul.f32 %v16, %v23
  %v28 = vmul.f32 %v17, %v23
  %v29 = vld [vmem:[%s2] sm:$0x1]
  %v31 = vlaneseq
  %v32 = vshrl.u32 %v31, 7
  %v33 = vsub.s32 0, %v32
  %v34 = vrot.slane %v29, %v33
  %v36 = vadd.f32 %v25, %v34
  %v37 = vadd.f32 %v26, %v34
  %v38 = vadd.f32 %v27, %v34
  %v39 = vadd.f32 %v28, %v34
  %vm40 = vcmp.ge.f32.partialorder %v36, 0.0
  %vm41 = vcmp.ge.f32.partialorder %v37, 0.0
  %vm42 = vcmp.ge.f32.partialorder %v38, 0.0
  %vm43 = vcmp.ge.f32.partialorder %v39, 0.0
  %v44 = vmul.f32 %v36, 0.2
  %v45 = vmul.f32 %v37, 0.2
  %v46 = vmul.f32 %v38, 0.2
  %v47 = vmul.f32 %v39, 0.2
  %v48 = vsel %vm40, %v36, %v44
  %v49 = vsel %vm41, %v37, %v45
  %v50 = vsel %vm42, %v38, %v46
  %v51 = vsel %vm43, %v39, %v47
  %v52 = vpack.c.bf16 %v49, %v48
  %v53 = vpack.c.bf16 %v51, %v50
  %v56 = vunpack.c.l.b16 %v52
  %v57 = vunpack.c.h.b16 %v52
  %v58 = vunpack.c.l.b16 %v53
  %v59 = vunpack.c.h.b16 %v53
  %v60 = vpack.c.b16 %v56, %v56
  %v61 = vpack.c.b16 %v57, %v57
  %v62 = vpack.c.b16 %v58, %v58
  %v63 = vpack.c.b16 %v59, %v59
  %68 = vst [vmem:[%s3] sm:$0xf] %v60
  %69 = vst [vmem:[%s3 + $0x4] sm:$0xf] %v61
  %70 = vst [vmem:[%s3 + $0x8] sm:$0xf] %v62
  %71 = vst [vmem:[%s3 + $0xc] sm:$0xf] %v63
  // Predicated region
  $region14: #{discriminator_forward.8} parent=0 // pred_check
    _
  $region15: #{discriminator_forward.8} parent=0 // pred_check_branch
    %73 = sbr.rel (0) target = $region17
  $region16: #{discriminator_forward.8} parent=0 // pred_region
    _
  $region17: #{discriminator_forward.8} parent=0 // pred_fallthru
    _
  // Predicated region
  $region18: #{discriminator_forward.8} parent=0 // pred_check
    _
  $region19: #{discriminator_forward.8} parent=0 // pred_check_branch
    %75 = sbr.rel (0) target = $region21
  $region20: #{discriminator_forward.8} parent=0 // pred_region
    _
  $region21: #{discriminator_forward.8} parent=0 // pred_fallthru
    _

// kernel: discriminator_forward.10
$region0: #{discriminator_forward.10}
  #allocation0 [shape = 'u32[]', space=smem, size = 0x4, offset = 0x4, fixed_abs, tag = 'smem constant byte address 0x4 - core index']
  #allocation1 [shape = 'u32[144,128]{1,0:T(1,128)}', space=vmem, size = 0x12000, scoped, tag = 'internal scratch']
  %s0 = inlined_call_operand.vmem [shape: f32[8,128], index: 0, kind: input, shape index: {}]
  %s1 = inlined_call_operand.vmem [shape: f32[1,128], index: 1, kind: input, shape index: {}]
  %s2 = inlined_call_operand.vmem [shape: f32[1,128], index: 2, kind: input, shape index: {}]
  %s3 = inlined_call_operand.vmem [shape: bf16[8,128], index: 3, kind: output, shape index: {}]
  %s4 = sld [smem:[#allocation0]]
  $region22: #{discriminator_forward.10} parent=0
    _
  %s6 = ssub.s32 1, %s4
  %s7 = scalar_select 0, %s6, %s4
  // Predicated region
  $region2: #{discriminator_forward.10} parent=0 // pred_check
    _
  $region3: #{discriminator_forward.10} parent=0 // pred_check_branch
    %9 = sbr.rel (0) target = $region5
  $region4: #{discriminator_forward.10} parent=0 // pred_region
    _
  $region5: #{discriminator_forward.10} parent=0 // pred_fallthru
    _
  // Predicated region
  $region6: #{discriminator_forward.10} parent=0 // pred_check
    _
  $region7: #{discriminator_forward.10} parent=0 // pred_check_branch
    %11 = sbr.rel (0) target = $region9
  $region8: #{discriminator_forward.10} parent=0 // pred_region
    _
  $region9: #{discriminator_forward.10} parent=0 // pred_fallthru
    _
  // Predicated region
  $region10: #{discriminator_forward.10} parent=0 // pred_check
    _
  $region11: #{discriminator_forward.10} parent=0 // pred_check_branch
    %13 = sbr.rel (0) target = $region13
  $region12: #{discriminator_forward.10} parent=0 // pred_region
    _
  $region13: #{discriminator_forward.10} parent=0 // pred_fallthru
    _
  %v14 = vld [vmem:[%s0] sm:$0xff]
  %v15 = vld [vmem:[%s1] sm:$0x1]
  %v17 = vlaneseq
  %v18 = vshrl.u32 %v17, 7
  %v19 = vsub.s32 0, %v18
  %v20 = vrot.slane %v15, %v19
  %v22 = vmul.f32 %v14, %v20
  %v23 = vld [vmem:[%s2] sm:$0x1]
  %v25 = vlaneseq
  %v26 = vshrl.u32 %v25, 7
  %v27 = vsub.s32 0, %v26
  %v28 = vrot.slane %v23, %v27
  %v30 = vadd.f32 %v22, %v28
  %vm31 = vcmp.ge.f32.partialorder %v30, 0.0
  %v32 = vmul.f32 %v30, 0.2
  %v33 = vsel %vm31, %v30, %v32
  %v34 = vpack.c.bf16 %v33, %v33
  %35 = vst [vmem:[%s3] sm:$0xf] %v34
  // Predicated region
  $region14: #{discriminator_forward.10} parent=0 // pred_check
    _
  $region15: #{discriminator_forward.10} parent=0 // pred_check_branch
    %37 = sbr.rel (0) target = $region17
  $region16: #{discriminator_forward.10} parent=0 // pred_region
    _
  $region17: #{discriminator_forward.10} parent=0 // pred_fallthru
    _
  // Predicated region
  $region18: #{discriminator_forward.10} parent=0 // pred_check
    _
  $region19: #{discriminator_forward.10} parent=0 // pred_check_branch
    %39 = sbr.rel (0) target = $region21
  $region20: #{discriminator_forward.10} parent=0 // pred_region
    _
  $region21: #{discriminator_forward.10} parent=0 // pred_fallthru
    _

// kernel: discriminator_forward.9
$region0: #{discriminator_forward.9}
  #allocation0 [shape = 'u32[]', space=smem, size = 0x4, offset = 0x4, fixed_abs, tag = 'smem constant byte address 0x4 - core index']
  #allocation1 [shape = 'u32[144,128]{1,0:T(1,128)}', space=vmem, size = 0x12000, scoped, tag = 'internal scratch']
  %s0 = inlined_call_operand.vmem [shape: bf16[8,256], index: 0, kind: input, shape index: {}]
  %s1 = inlined_call_operand.vmem [shape: bf16[256,128], index: 1, kind: input, shape index: {}]
  %s2 = inlined_call_operand.vmem [shape: f32[8,128], index: 2, kind: output, shape index: {0}]
  %s3 = inlined_call_operand.vmem [shape: f32[8,128], index: 3, kind: output, shape index: {1}]
  %s4 = inlined_call_operand.vmem [shape: f32[8,128], index: 4, kind: output, shape index: {2}]
  %5 = xla_tuple %s2, %s3, %s4
  %s6 = sld [smem:[#allocation0]]
  $region38: #{discriminator_forward.9} parent=0
    _
  %s8 = ssub.s32 1, %s6
  %s9 = scalar_select 0, %s8, %s6
  // Predicated region
  $region2: #{discriminator_forward.9} parent=0 // pred_check
    _
  $region3: #{discriminator_forward.9} parent=0 // pred_check_branch
    %11 = sbr.rel (0) target = $region5
  $region4: #{discriminator_forward.9} parent=0 // pred_region
    _
  $region5: #{discriminator_forward.9} parent=0 // pred_fallthru
    _
  // Predicated region
  $region6: #{discriminator_forward.9} parent=0 // pred_check
    _
  $region7: #{discriminator_forward.9} parent=0 // pred_check_branch
    %13 = sbr.rel (0) target = $region9
  $region8: #{discriminator_forward.9} parent=0 // pred_region
    _
  $region9: #{discriminator_forward.9} parent=0 // pred_fallthru
    _
  %v15 = vld [vmem:[%s0] sm:$0xff]
  %v16 = vld [vmem:[%s1] sm:$0xf]
  %v17 = vld [vmem:[%s1 + $0x4] sm:$0xf]
  %v18 = vld [vmem:[%s1 + $0x8] sm:$0xf]
  %v19 = vld [vmem:[%s1 + $0xc] sm:$0xf]
  %v20 = vld [vmem:[%s1 + $0x10] sm:$0xf]
  %v21 = vld [vmem:[%s1 + $0x14] sm:$0xf]
  %v22 = vld [vmem:[%s1 + $0x18] sm:$0xf]
  %v23 = vld [vmem:[%s1 + $0x1c] sm:$0xf]
  %v24 = vld [vmem:[%s1 + $0x20] sm:$0xf]
  %v25 = vld [vmem:[%s1 + $0x24] sm:$0xf]
  %v26 = vld [vmem:[%s1 + $0x28] sm:$0xf]
  %v27 = vld [vmem:[%s1 + $0x2c] sm:$0xf]
  %v28 = vld [vmem:[%s1 + $0x30] sm:$0xf]
  %v29 = vld [vmem:[%s1 + $0x34] sm:$0xf]
  %v30 = vld [vmem:[%s1 + $0x38] sm:$0xf]
  %v31 = vld [vmem:[%s1 + $0x3c] sm:$0xf]
  %v32 = vld [vmem:[%s1 + $0x40] sm:$0xf]
  %v33 = vld [vmem:[%s1 + $0x44] sm:$0xf]
  %v34 = vld [vmem:[%s1 + $0x48] sm:$0xf]
  %v35 = vld [vmem:[%s1 + $0x4c] sm:$0xf]
  %v36 = vld [vmem:[%s1 + $0x50] sm:$0xf]
  %v37 = vld [vmem:[%s1 + $0x54] sm:$0xf]
  %v38 = vld [vmem:[%s1 + $0x58] sm:$0xf]
  %v39 = vld [vmem:[%s1 + $0x5c] sm:$0xf]
  %v40 = vld [vmem:[%s1 + $0x60] sm:$0xf]
  %v41 = vld [vmem:[%s1 + $0x64] sm:$0xf]
  %v42 = vld [vmem:[%s1 + $0x68] sm:$0xf]
  %v43 = vld [vmem:[%s1 + $0x6c] sm:$0xf]
  %v44 = vld [vmem:[%s1 + $0x70] sm:$0xf]
  %v45 = vld [vmem:[%s1 + $0x74] sm:$0xf]
  %v46 = vld [vmem:[%s1 + $0x78] sm:$0xf]
  %v47 = vld [vmem:[%s1 + $0x7c] sm:$0xf]
  %v49 = vunpack.c.l.b16 %v15
  %v50 = vunpack.c.h.b16 %v15
  %v51 = vpack.c.b16 %v49, %v49
  %v52 = vpack.c.b16 %v50, %v50
  %v87 = vunpack.c.l.b16 %v16
  %v88 = vunpack.c.l.b16 %v17
  %v89 = vunpack.c.l.b16 %v18
  %v90 = vunpack.c.l.b16 %v19
  %v91 = vunpack.c.l.b16 %v20
  %v92 = vunpack.c.l.b16 %v21
  %v93 = vunpack.c.l.b16 %v22
  %v94 = vunpack.c.l.b16 %v23
  %v95 = vunpack.c.l.b16 %v24
  %v96 = vunpack.c.l.b16 %v25
  %v97 = vunpack.c.l.b16 %v26
  %v98 = vunpack.c.l.b16 %v27
  %v99 = vunpack.c.l.b16 %v28
  %v100 = vunpack.c.l.b16 %v29
  %v101 = vunpack.c.l.b16 %v30
  %v102 = vunpack.c.l.b16 %v31
  %v103 = vunpack.c.l.b16 %v32
  %v104 = vunpack.c.l.b16 %v33
  %v105 = vunpack.c.l.b16 %v34
  %v106 = vunpack.c.l.b16 %v35
  %v107 = vunpack.c.l.b16 %v36
  %v108 = vunpack.c.l.b16 %v37
  %v109 = vunpack.c.l.b16 %v38
  %v110 = vunpack.c.l.b16 %v39
  %v111 = vunpack.c.l.b16 %v40
  %v112 = vunpack.c.l.b16 %v41
  %v113 = vunpack.c.l.b16 %v42
  %v114 = vunpack.c.l.b16 %v43
  %v115 = vunpack.c.l.b16 %v44
  %v116 = vunpack.c.l.b16 %v45
  %v117 = vunpack.c.l.b16 %v46
  %v118 = vunpack.c.l.b16 %v47
  %v119 = vpack.c.b16 %v88, %v87
  %v120 = vpack.c.b16 %v90, %v89
  %v121 = vpack.c.b16 %v92, %v91
  %v122 = vpack.c.b16 %v94, %v93
  %v123 = vpack.c.b16 %v96, %v95
  %v124 = vpack.c.b16 %v98, %v97
  %v125 = vpack.c.b16 %v100, %v99
  %v126 = vpack.c.b16 %v102, %v101
  %v127 = vpack.c.b16 %v104, %v103
  %v128 = vpack.c.b16 %v106, %v105
  %v129 = vpack.c.b16 %v108, %v107
  %v130 = vpack.c.b16 %v110, %v109
  %v131 = vpack.c.b16 %v112, %v111
  %v132 = vpack.c.b16 %v114, %v113
  %v133 = vpack.c.b16 %v116, %v115
  %v134 = vpack.c.b16 %v118, %v117
  %151 = vmatprep.subr.bf16.mxu0 0
  %152 = vmatpush1.bf16.msra.mxu0 %v119
  %153 = vmatprep.subr.bf16.mxu0 0
  %154 = vmatpush1.bf16.msra.mxu0 %v120
  %155 = vmatprep.subr.bf16.mxu0 0
  %156 = vmatpush1.bf16.msra.mxu0 %v121
  %157 = vmatprep.subr.bf16.mxu0 0
  %158 = vmatpush1.bf16.msra.mxu0 %v122
  %159 = vmatprep.subr.bf16.mxu0 0
  %160 = vmatpush1.bf16.msra.mxu0 %v123
  %161 = vmatprep.subr.bf16.mxu0 0
  %162 = vmatpush1.bf16.msra.mxu0 %v124
  %163 = vmatprep.subr.bf16.mxu0 0
  %164 = vmatpush1.bf16.msra.mxu0 %v125
  %165 = vmatprep.subr.bf16.mxu0 0
  %166 = vmatpush1.bf16.msra.mxu0 %v126
  %167 = vmatprep.subr.bf16.mxu0 0
  %168 = vmatpush1.bf16.msra.mxu0 %v127
  %169 = vmatprep.subr.bf16.mxu0 0
  %170 = vmatpush1.bf16.msra.mxu0 %v128
  %171 = vmatprep.subr.bf16.mxu0 0
  %172 = vmatpush1.bf16.msra.mxu0 %v129
  %173 = vmatprep.subr.bf16.mxu0 0
  %174 = vmatpush1.bf16.msra.mxu0 %v130
  %175 = vmatprep.subr.bf16.mxu0 0
  %176 = vmatpush1.bf16.msra.mxu0 %v131
  %177 = vmatprep.subr.bf16.mxu0 0
  %178 = vmatpush1.bf16.msra.mxu0 %v132
  %179 = vmatprep.subr.bf16.mxu0 0
  %180 = vmatpush1.bf16.msra.mxu0 %v133
  %181 = vmatprep.subr.bf16.mxu0 0
  %182 = vmatpush1.bf16.msra.mxu0 %v134
  %183 = vmatprep.mubr.bf16.mxu0 %v52
  %184 = vmatmul.mubr.bf16.gmra.mrb[0].mxu0 %v51
  %v185 = vpop.f32.mrb[0].mxu0
  %v186 = vadd.f32 0.0, %v185
  %v187 = vpop.f32.mrb[0].mxu0
  %v188 = vpop.f32.mrb[0].mxu0
  %v189 = vpop.f32.mrb[0].mxu0
  %190 = vdwg.mxu0
  %191 = vst [vmem:[%s2] sm:$0xff] %v186
  %p192 = scmp.eq.s32.totalorder 0, 0
  // Predicated region
  $region10: #{discriminator_forward.9} parent=0 // pred_check
    %p193 = pneg %p192
  $region11: #{discriminator_forward.9} parent=0 // pred_check_branch
    %195 = sbr.rel (%p193) target = $region13
  $region12: #{discriminator_forward.9} parent=0 // pred_region
    %196 = vst [vmem:[%s3] sm:$0xff] 0.0
    %197 = vst [vmem:[%s4] sm:$0xff] 0.0
  $region13: #{discriminator_forward.9} parent=0 // pred_fallthru
    _
  %v198 = vld [vmem:[%s3] sm:$0xff]
  %v199 = vrot.slane %v186, 4
  %v200 = vadd.f32 %v186, %v199
  %v201 = vrot.slane %v200, 2
  %v202 = vadd.f32 %v200, %v201
  %v203 = vrot.slane %v202, 1
  %v204 = vadd.f32 %v202, %v203
  %v205 = vadd.f32 %v198, %v204
  %206 = vst [vmem:[%s3] sm:$0xff] %v205
  %v207 = vld [vmem:[%s4] sm:$0xff]
  %v208 = vmul.f32 %v186, %v186
  %v209 = vrot.slane %v208, 4
  %v210 = vadd.f32 %v208, %v209
  %v211 = vrot.slane %v210, 2
  %v212 = vadd.f32 %v210, %v211
  %v213 = vrot.slane %v212, 1
  %v214 = vadd.f32 %v212, %v213
  %v215 = vadd.f32 %v207, %v214
  %216 = vst [vmem:[%s4] sm:$0xff] %v215
  // Predicated region
  $region14: #{discriminator_forward.9} parent=0 // pred_check
    _
  $region15: #{discriminator_forward.9} parent=0 // pred_check_branch
    %218 = sbr.rel (0) target = $region17
  $region16: #{discriminator_forward.9} parent=0 // pred_region
    _
  $region17: #{discriminator_forward.9} parent=0 // pred_fallthru
    _
  // Predicated region
  $region18: #{discriminator_forward.9} parent=0 // pred_check
    _
  $region19: #{discriminator_forward.9} parent=0 // pred_check_branch
    %220 = sbr.rel (0) target = $region21
  $region20: #{discriminator_forward.9} parent=0 // pred_region
    _
  $region21: #{discriminator_forward.9} parent=0 // pred_fallthru
    _
  // Predicated region
  $region22: #{discriminator_forward.9} parent=0 // pred_check
    _
  $region23: #{discriminator_forward.9} parent=0 // pred_check_branch
    %222 = sbr.rel (0) target = $region25
  $region24: #{discriminator_forward.9} parent=0 // pred_region
    _
  $region25: #{discriminator_forward.9} parent=0 // pred_fallthru
    _
  // Predicated region
  $region26: #{discriminator_forward.9} parent=0 // pred_check
    _
  $region27: #{discriminator_forward.9} parent=0 // pred_check_branch
    %224 = sbr.rel (0) target = $region29
  $region28: #{discriminator_forward.9} parent=0 // pred_region
    _
  $region29: #{discriminator_forward.9} parent=0 // pred_fallthru
    _
  // Predicated region
  $region30: #{discriminator_forward.9} parent=0 // pred_check
    _
  $region31: #{discriminator_forward.9} parent=0 // pred_check_branch
    %226 = sbr.rel (0) target = $region33
  $region32: #{discriminator_forward.9} parent=0 // pred_region
    _
  $region33: #{discriminator_forward.9} parent=0 // pred_fallthru
    _
  // Predicated region
  $region34: #{discriminator_forward.9} parent=0 // pred_check
    _
  $region35: #{discriminator_forward.9} parent=0 // pred_check_branch
    %228 = sbr.rel (0) target = $region37
  $region36: #{discriminator_forward.9} parent=0 // pred_region
    _
  $region37: #{discriminator_forward.9} parent=0 // pred_fallthru
    _

// kernel: discriminator_forward.11
$region0: #{discriminator_forward.11}
  #allocation0 [shape = 'u32[]', space=smem, size = 0x4, offset = 0x4, fixed_abs, tag = 'smem constant byte address 0x4 - core index']
  #allocation1 [shape = 'u32[144,128]{1,0:T(1,128)}', space=vmem, size = 0x12000, scoped, tag = 'internal scratch']
  %s0 = inlined_call_operand.vmem [shape: bf16[8,128], index: 0, kind: input, shape index: {}]
  %s1 = inlined_call_operand.vmem [shape: bf16[128,128], index: 1, kind: input, shape index: {}]
  %s2 = inlined_call_operand.vmem [shape: f32[8,128], index: 2, kind: output, shape index: {}]
  %s3 = sld [smem:[#allocation0]]
  $region26: #{discriminator_forward.11} parent=0
    _
  %s5 = ssub.s32 1, %s3
  %s6 = scalar_select 0, %s5, %s3
  // Predicated region
  $region2: #{discriminator_forward.11} parent=0 // pred_check
    _
  $region3: #{discriminator_forward.11} parent=0 // pred_check_branch
    %8 = sbr.rel (0) target = $region5
  $region4: #{discriminator_forward.11} parent=0 // pred_region
    _
  $region5: #{discriminator_forward.11} parent=0 // pred_fallthru
    _
  // Predicated region
  $region6: #{discriminator_forward.11} parent=0 // pred_check
    _
  $region7: #{discriminator_forward.11} parent=0 // pred_check_branch
    %10 = sbr.rel (0) target = $region9
  $region8: #{discriminator_forward.11} parent=0 // pred_region
    _
  $region9: #{discriminator_forward.11} parent=0 // pred_fallthru
    _
  %p12 = scmp.eq.s32.totalorder 0, 0
  // Predicated region
  $region10: #{discriminator_forward.11} parent=0 // pred_check
    %p13 = pneg %p12
  $region11: #{discriminator_forward.11} parent=0 // pred_check_branch
    %15 = sbr.rel (%p13) target = $region13
  $region12: #{discriminator_forward.11} parent=0 // pred_region
    %16 = vst [vmem:[%s2] sm:$0xff] 0.0
  $region13: #{discriminator_forward.11} parent=0 // pred_fallthru
    _
  %v17 = vld [vmem:[%s2] sm:$0xff]
  %v18 = vld [vmem:[%s0] sm:$0xf]
  %v19 = vld [vmem:[%s1] sm:$0xf]
  %v20 = vld [vmem:[%s1 + $0x4] sm:$0xf]
  %v21 = vld [vmem:[%s1 + $0x8] sm:$0xf]
  %v22 = vld [vmem:[%s1 + $0xc] sm:$0xf]
  %v23 = vld [vmem:[%s1 + $0x10] sm:$0xf]
  %v24 = vld [vmem:[%s1 + $0x14] sm:$0xf]
  %v25 = vld [vmem:[%s1 + $0x18] sm:$0xf]
  %v26 = vld [vmem:[%s1 + $0x1c] sm:$0xf]
  %v27 = vld [vmem:[%s1 + $0x20] sm:$0xf]
  %v28 = vld [vmem:[%s1 + $0x24] sm:$0xf]
  %v29 = vld [vmem:[%s1 + $0x28] sm:$0xf]
  %v30 = vld [vmem:[%s1 + $0x2c] sm:$0xf]
  %v31 = vld [vmem:[%s1 + $0x30] sm:$0xf]
  %v32 = vld [vmem:[%s1 + $0x34] sm:$0xf]
  %v33 = vld [vmem:[%s1 + $0x38] sm:$0xf]
  %v34 = vld [vmem:[%s1 + $0x3c] sm:$0xf]
  %v51 = vunpack.c.l.b16 %v19
  %v52 = vunpack.c.l.b16 %v20
  %v53 = vunpack.c.l.b16 %v21
  %v54 = vunpack.c.l.b16 %v22
  %v55 = vunpack.c.l.b16 %v23
  %v56 = vunpack.c.l.b16 %v24
  %v57 = vunpack.c.l.b16 %v25
  %v58 = vunpack.c.l.b16 %v26
  %v59 = vunpack.c.l.b16 %v27
  %v60 = vunpack.c.l.b16 %v28
  %v61 = vunpack.c.l.b16 %v29
  %v62 = vunpack.c.l.b16 %v30
  %v63 = vunpack.c.l.b16 %v31
  %v64 = vunpack.c.l.b16 %v32
  %v65 = vunpack.c.l.b16 %v33
  %v66 = vunpack.c.l.b16 %v34
  %v67 = vpack.c.b16 %v52, %v51
  %v68 = vpack.c.b16 %v54, %v53
  %v69 = vpack.c.b16 %v56, %v55
  %v70 = vpack.c.b16 %v58, %v57
  %v71 = vpack.c.b16 %v60, %v59
  %v72 = vpack.c.b16 %v62, %v61
  %v73 = vpack.c.b16 %v64, %v63
  %v74 = vpack.c.b16 %v66, %v65
  %83 = vmatprep.subr.bf16.mxu0 0
  %84 = vmatpush1.bf16.msra.mxu0 %v67
  %85 = vmatprep.subr.bf16.mxu0 0
  %86 = vmatpush1.bf16.msra.mxu0 %v68
  %87 = vmatprep.subr.bf16.mxu0 0
  %88 = vmatpush1.bf16.msra.mxu0 %v69
  %89 = vmatprep.subr.bf16.mxu0 0
  %90 = vmatpush1.bf16.msra.mxu0 %v70
  %91 = vmatprep.subr.bf16.mxu0 0
  %92 = vmatpush1.bf16.msra.mxu0 %v71
  %93 = vmatprep.subr.bf16.mxu0 0
  %94 = vmatpush1.bf16.msra.mxu0 %v72
  %95 = vmatprep.subr.bf16.mxu0 0
  %96 = vmatpush1.bf16.msra.mxu0 %v73
  %97 = vmatprep.subr.bf16.mxu0 0
  %98 = vmatpush1.bf16.msra.mxu0 %v74
  %99 = vmatprep.subr.bf16.mxu0 0
  %100 = vmatpush1.bf16.msra.mxu0 0
  %101 = vmatprep.subr.bf16.mxu0 0
  %102 = vmatpush1.bf16.msra.mxu0 0
  %103 = vmatprep.subr.bf16.mxu0 0
  %104 = vmatpush1.bf16.msra.mxu0 0
  %105 = vmatprep.subr.bf16.mxu0 0
  %106 = vmatpush1.bf16.msra.mxu0 0
  %107 = vmatprep.subr.bf16.mxu0 0
  %108 = vmatpush1.bf16.msra.mxu0 0
  %109 = vmatprep.subr.bf16.mxu0 0
  %110 = vmatpush1.bf16.msra.mxu0 0
  %111 = vmatprep.subr.bf16.mxu0 0
  %112 = vmatpush1.bf16.msra.mxu0 0
  %113 = vmatprep.subr.bf16.mxu0 0
  %114 = vmatpush1.bf16.msra.mxu0 0
  %115 = vmatprep.mubr.bf16.mxu0 0
  %116 = vmatmul.mubr.bf16.gmra.mrb[0].mxu0 %v18
  %v117 = vpop.f32.mrb[0].mxu0
  %v118 = vadd.f32 0.0, %v117
  %v119 = vpop.f32.mrb[0].mxu0
  %v120 = vpop.f32.mrb[0].mxu0
  %v121 = vpop.f32.mrb[0].mxu0
  %122 = vdwg.mxu0
  %v123 = vadd.f32 %v17, %v118
  %124 = vst [vmem:[%s2] sm:$0xff] %v123
  // Predicated region
  $region14: #{discriminator_forward.11} parent=0 // pred_check
    %p125 = pneg %p12
  $region15: #{discriminator_forward.11} parent=0 // pred_check_branch
    %127 = sbr.rel (%p125) target = $region17
  $region16: #{discriminator_forward.11} parent=0 // pred_region
    %v128 = vld [vmem:[%s2] sm:$0xff]
    %v129 = vxor.u32 %v128, 2147483648
    %v130 = vmul.f32 %v129, 1.442695
    %v131 = vpow.pop %v130
    %v132 = vadd.f32 %v131, 1.0
    %v133 = vrcp.pop %v132
    %v134 = vmul.f32 1.0, %v133
    %135 = vst [vmem:[%s2] sm:$0xff] %v134
  $region17: #{discriminator_forward.11} parent=0 // pred_fallthru
    _
  // Predicated region
  $region18: #{discriminator_forward.11} parent=0 // pred_check
    _
  $region19: #{discriminator_forward.11} parent=0 // pred_check_branch
    %137 = sbr.rel (0) target = $region21
  $region20: #{discriminator_forward.11} parent=0 // pred_region
    _
  $region21: #{discriminator_forward.11} parent=0 // pred_fallthru
    _
  // Predicated region
  $region22: #{discriminator_forward.11} parent=0 // pred_check
    _
  $region23: #{discriminator_forward.11} parent=0 // pred_check_branch
    %139 = sbr.rel (0) target = $region25
  $region24: #{discriminator_forward.11} parent=0 // pred_region
    _
  $region25: #{discriminator_forward.11} parent=0 // pred_fallthru
    _

</llo_original>
